<compile_context>
chip_gen: v5e
topology: v5e:2x2
jax: 0.10.0
libtpu: 0.0.40
codegen_flags: <defaults>
</compile_context>

<pallas_src>
import functools

import jax
import jax.numpy as jnp
from jax.experimental import pallas as pl
from jax.experimental.pallas import tpu as pltpu

CPAD = 128      # lane-dense channel padding unit
SUBLANE = 16    # bf16 sublane packing -> keep in-kernel row offsets 16-aligned

_CompilerParams = getattr(pltpu, "CompilerParams", None)
if _CompilerParams is None:  # very old jax fallback
    _CompilerParams = getattr(pltpu, "TPUCompilerParams")


def _round_up(x, m):
    return ((x + m - 1) // m) * m


def cpad(c):
    return _round_up(c, CPAD)


def _compiler_params(dims, block_bytes):
    # explicit scoped-VMEM limit sized from the blocks (headroom for double
    # buffering + internal scratch), clamped well under v7x's 64 MiB.
    vmem = int(min(max(6 * block_bytes, 16 * 1024 * 1024), 48 * 1024 * 1024))
    return _CompilerParams(dimension_semantics=dims, vmem_limit_bytes=vmem)


def _cost(flops, bytes_accessed):
    if hasattr(pl, "CostEstimate"):
        return pl.CostEstimate(flops=int(flops), transcendentals=0,
                               bytes_accessed=int(bytes_accessed))
    return None


# -----------------------------------------------------------------------------
# Fused 3x3 conv (bias + optional ReLU) kernel
# -----------------------------------------------------------------------------
def _conv3x3_kernel(x0_ref, x1_ref, x2_ref, w_ref, b_ref, o_ref, *,
                    n_rows, wt, cin_p, relu):
    # x{dw}_ref : (1, (H+2)*Wt, Cin_p) bf16 -- width-shifted flattened input
    # w_ref     : (9*Cin_p, Cout_p)    bf16
    # b_ref     : (1, Cout_p)          f32
    # o_ref     : (1, H*Wt, Cout_p)
    xs = (x0_ref, x1_ref, x2_ref)
    acc = None
    for dh in range(3):
        row0 = dh * wt                       # multiple of 16 -> aligned slice
        for dw in range(3):
            t = dh * 3 + dw
            lhs = xs[dw][0, row0:row0 + n_rows, :]
            rhs = w_ref[t * cin_p:(t + 1) * cin_p, :]
            prod = jnp.dot(lhs, rhs, preferred_element_type=jnp.float32)
            acc = prod if acc is None else acc + prod
    acc = acc + b_ref[...]                   # f32 epilogue (v5e-friendly)
    if relu:
        acc = jnp.maximum(acc, 0.0)
    o_ref[0] = acc.astype(o_ref.dtype)


def conv3x3(x, w_flat, b, relu=True, out_dtype=jnp.bfloat16):
    """3x3 'same' conv.  x: (N,H,W,Cp) (channels lane-padded), w_flat: (9*Cp,Coutp)."""
    N, H, W, Cp = x.shape
    Coutp = w_flat.shape[1]
    Wt = _round_up(W, SUBLANE)               # extra zero cols -> cropped after
    n_rows = H * Wt
    in_rows = (H + 2) * Wt

    x = x.astype(jnp.bfloat16)
    # conv halo pad (1 px) + right zero pad up to Wt
    xp = jnp.pad(x, ((0, 0), (1, 1), (1, Wt - W + 1), (0, 0)))
    # three width-shifted flattened views (3x input bytes, not the 9x im2col)
    s0 = xp[:, :, 0:Wt, :].reshape(N, in_rows, Cp)
    s1 = xp[:, :, 1:1 + Wt, :].reshape(N, in_rows, Cp)
    s2 = xp[:, :, 2:2 + Wt, :].reshape(N, in_rows, Cp)

    out_isz = jnp.dtype(out_dtype).itemsize
    block_bytes = (3 * in_rows * Cp * 2 + 9 * Cp * Coutp * 2 + Coutp * 4
                   + n_rows * Coutp * out_isz + n_rows * Coutp * 4)
    flops = 2 * N * n_rows * 9 * Cp * Coutp
    bytes_accessed = (3 * N * in_rows * Cp * 2 + 9 * Cp * Coutp * 2
                      + N * n_rows * Coutp * out_isz)

    out = pl.pallas_call(
        functools.partial(_conv3x3_kernel, n_rows=n_rows, wt=Wt, cin_p=Cp,
                          relu=relu),
        out_shape=jax.ShapeDtypeStruct((N, n_rows, Coutp), out_dtype),
        grid=(N,),
        in_specs=[
            pl.BlockSpec((1, in_rows, Cp), lambda f: (f, 0, 0)),
            pl.BlockSpec((1, in_rows, Cp), lambda f: (f, 0, 0)),
            pl.BlockSpec((1, in_rows, Cp), lambda f: (f, 0, 0)),
            pl.BlockSpec((9 * Cp, Coutp), lambda f: (0, 0)),   # weights resident
            pl.BlockSpec((1, Coutp), lambda f: (0, 0)),
        ],
        out_specs=pl.BlockSpec((1, n_rows, Coutp), lambda f: (f, 0, 0)),
        compiler_params=_compiler_params(("parallel",), block_bytes),
        cost_estimate=_cost(flops, bytes_accessed),
    )(s0, s1, s2, w_flat.astype(jnp.bfloat16),
      b.reshape(1, Coutp).astype(jnp.float32))

    out = out.reshape(N, H, Wt, Coutp)
    return out[:, :, :W, :]


# -----------------------------------------------------------------------------
# M-tiled fused matmul + bias + optional ReLU (used for the 1x1 prototype head)
# -----------------------------------------------------------------------------
def _matmul_bias_act_kernel(x_ref, w_ref, b_ref, o_ref, *, relu):
    acc = jnp.dot(x_ref[...], w_ref[...], preferred_element_type=jnp.float32)
    acc = acc + b_ref[...]
    if relu:
        acc = jnp.maximum(acc, 0.0)
    o_ref[...] = acc.astype(o_ref.dtype)


def matmul_bias_act(x, w, b, relu=False, out_dtype=jnp.float32, tm=512):
    M, K = x.shape
    N = w.shape[1]
    tm_eff = min(tm, _round_up(M, SUBLANE))
    Mp = _round_up(M, tm_eff)
    xp = jnp.pad(x.astype(jnp.bfloat16), ((0, Mp - M), (0, 0)))
    out_isz = jnp.dtype(out_dtype).itemsize
    block_bytes = tm_eff * K * 2 + K * N * 2 + N * 4 + tm_eff * N * (out_isz + 4)
    out = pl.pallas_call(
        functools.partial(_matmul_bias_act_kernel, relu=relu),
        out_shape=jax.ShapeDtypeStruct((Mp, N), out_dtype),
        grid=(Mp // tm_eff,),
        in_specs=[
            pl.BlockSpec((tm_eff, K), lambda i: (i, 0)),
            pl.BlockSpec((K, N), lambda i: (0, 0)),
            pl.BlockSpec((1, N), lambda i: (0, 0)),
        ],
        out_specs=pl.BlockSpec((tm_eff, N), lambda i: (i, 0)),
        compiler_params=_compiler_params(("parallel",), block_bytes),
        cost_estimate=_cost(2 * Mp * K * N,
                            Mp * K * 2 + K * N * 2 + Mp * N * out_isz),
    )(xp, w.astype(jnp.bfloat16), b.reshape(1, N).astype(jnp.float32))
    return out[:M]


# -----------------------------------------------------------------------------
# Fused per-channel mean / unbiased std / noise*std + mean (3 samples at once)
# -----------------------------------------------------------------------------
def _sample_latents_kernel(proto_ref, noise_ref, out_ref, *, num_samples):
    x = proto_ref[...]                               # (C, HW) f32
    n = x.shape[-1]
    m = jnp.mean(x, axis=-1, keepdims=True)
    denom = float(max(n - 1, 1))                     # torch.std unbiased; guard HW==1
    std = jnp.sqrt(jnp.sum((x - m) ** 2, axis=-1, keepdims=True) / denom)
    for s in range(num_samples):
        out_ref[s] = noise_ref[s] * std + m


def sample_latents(proto_cs, noise):
    """proto_cs: (C, HW) f32 ; noise: (S, C, HW) f32 -> noise*std + mean."""
    C, HW = proto_cs.shape
    S = noise.shape[0]
    block_bytes = (2 * S + 1) * C * HW * 4
    return pl.pallas_call(
        functools.partial(_sample_latents_kernel, num_samples=S),
        out_shape=jax.ShapeDtypeStruct((S, C, HW), jnp.float32),
        grid=(1,),
        in_specs=[
            pl.BlockSpec((C, HW), lambda i: (0, 0)),
            pl.BlockSpec((S, C, HW), lambda i: (0, 0, 0)),
        ],
        out_specs=pl.BlockSpec((S, C, HW), lambda i: (0, 0, 0)),
        compiler_params=_compiler_params(("arbitrary",), block_bytes),
    )(proto_cs.astype(jnp.float32), noise.astype(jnp.float32))


# -----------------------------------------------------------------------------
# Row-tiled MSE reduction with VMEM accumulator
# -----------------------------------------------------------------------------
def _mse_kernel(a_ref, b_ref, o_ref, acc_ref, *, inv_count):
    @pl.when(pl.program_id(0) == 0)
    def _init():
        acc_ref[...] = jnp.zeros_like(acc_ref)

    d = a_ref[...] - b_ref[...]
    acc_ref[...] += jnp.sum(d * d)

    @pl.when(pl.program_id(0) == pl.num_programs(0) - 1)
    def _finalize():
        o_ref[...] = acc_ref[...] * inv_count


def mse(a, b):
    a2 = a.astype(jnp.float32).reshape(-1, a.shape[-1])
    b2 = b.astype(jnp.float32).reshape(-1, b.shape[-1])
    R, C = a2.shape
    tr = min(512, _round_up(R, 8))
    Rp = _round_up(R, tr)
    a2 = jnp.pad(a2, ((0, Rp - R), (0, 0)))          # zero rows contribute 0
    b2 = jnp.pad(b2, ((0, Rp - R), (0, 0)))
    out = pl.pallas_call(
        functools.partial(_mse_kernel, inv_count=1.0 / float(R * C)),
        out_shape=jax.ShapeDtypeStruct((1, 1), jnp.float32),
        grid=(Rp // tr,),
        in_specs=[
            pl.BlockSpec((tr, C), lambda i: (i, 0)),
            pl.BlockSpec((tr, C), lambda i: (i, 0)),
        ],
        out_specs=pl.BlockSpec((1, 1), lambda i: (0, 0)),
        scratch_shapes=[pltpu.VMEM((1, 1), jnp.float32)],
        compiler_params=_compiler_params(("arbitrary",), 2 * tr * C * 4),
    )(a2, b2)
    return out[0, 0]


# -----------------------------------------------------------------------------
# Plain-JAX glue
# -----------------------------------------------------------------------------
def pool2x(x):
    N, H, W, C = x.shape
    return jnp.mean(x.reshape(N, H // 2, 2, W // 2, 2, C), axis=(2, 4)).astype(x.dtype)


def upsample2x(x):
    return jnp.repeat(jnp.repeat(x, 2, axis=1), 2, axis=2)


def nhwc_to_nchw(x):
    return jnp.transpose(x, (0, 3, 1, 2))


# -----------------------------------------------------------------------------
# Parameters (channels zero-padded to multiples of 128 => lane-dense kernels)
# -----------------------------------------------------------------------------
def _make_conv_w(key, cin_blocks, cout):
    cout_p = cpad(cout)
    cin_p_total = sum(cpad(c) for c in cin_blocks)
    W = jnp.zeros((3, 3, cin_p_total, cout_p), jnp.float32)
    off = 0
    keys = jax.random.split(key, len(cin_blocks))
    for k, c in zip(keys, cin_blocks):
        w_r = jax.random.normal(k, (3, 3, c, cout), jnp.float32) * 0.05
        W = W.at[:, :, off:off + c, :cout].set(w_r)
        off += cpad(c)
    w_flat = W.reshape(9 * cin_p_total, cout_p).astype(jnp.bfloat16)
    b = jnp.zeros((cout_p,), jnp.float32)
    return w_flat, b


def init_params(key):
    ks = jax.random.split(key, 10)
    p = {}
    # Encoder: 4 levels, bottleneck 256 channels (matches Decoder(256))
    p["enc1_w"], p["enc1_b"] = _make_conv_w(ks[0], [3], 16)
    p["enc2_w"], p["enc2_b"] = _make_conv_w(ks[1], [16], 32)
    p["enc3_w"], p["enc3_b"] = _make_conv_w(ks[2], [32], 64)
    p["enc4_w"], p["enc4_b"] = _make_conv_w(ks[3], [64], 256)
    # Prototype head: 1x1 conv on aggregated bottleneck
    p["proto_w"] = (jax.random.normal(ks[4], (256, 256), jnp.float32) * 0.05
                    ).astype(jnp.bfloat16)
    p["proto_b"] = jnp.zeros((256,), jnp.float32)
    # Decoder(256): U-Net style with skips
    p["dec3_w"], p["dec3_b"] = _make_conv_w(ks[5], [256, 64], 64)
    p["dec2_w"], p["dec2_b"] = _make_conv_w(ks[6], [64, 32], 32)
    p["dec1_w"], p["dec1_b"] = _make_conv_w(ks[7], [32, 16], 16)
    p["out_w"], p["out_b"] = _make_conv_w(ks[8], [16], 3)
    return p


# -----------------------------------------------------------------------------
# VADNet
# -----------------------------------------------------------------------------
class VADNetPallas:
    def __init__(self, key):
        self.params = init_params(key)

    @staticmethod
    def prep_data(img):
        # torch version only moves to CUDA / sets requires_grad -> no-op here
        return img

    @staticmethod
    def _prep_img(f):
        # NCHW (1,3,H,W) f32 -> lane-padded bf16 NHWC (1,H,W,128)
        x = jnp.transpose(f, (0, 2, 3, 1))
        c = x.shape[-1]
        x = jnp.pad(x, ((0, 0), (0, 0), (0, 0), (0, cpad(c) - c)))
        return x.astype(jnp.bfloat16)

    # ------------------------------------------------------------- sub-nets
    def encoder(self, x):
        p = self.params
        m1 = conv3x3(x, p["enc1_w"], p["enc1_b"], relu=True)              # (F,H,W,128[16])
        m2 = conv3x3(pool2x(m1), p["enc2_w"], p["enc2_b"], relu=True)     # (F,H/2,...,[32])
        m3 = conv3x3(pool2x(m2), p["enc3_w"], p["enc3_b"], relu=True)     # (F,H/4,...,[64])
        m4 = conv3x3(pool2x(m3), p["enc4_w"], p["enc4_b"], relu=True)     # (F,H/8,...,256)
        return m4, m3, m2, m1

    def prototype(self, feats):
        m4, m3, m2, m1 = feats
        m4a = jnp.mean(m4.astype(jnp.float32), axis=0, keepdims=True)
        m3a = jnp.mean(m3.astype(jnp.float32), axis=0, keepdims=True).astype(jnp.bfloat16)
        m2a = jnp.mean(m2.astype(jnp.float32), axis=0, keepdims=True).astype(jnp.bfloat16)
        m1a = jnp.mean(m1.astype(jnp.float32), axis=0, keepdims=True).astype(jnp.bfloat16)
        B, h8, w8, C = m4a.shape
        proto = matmul_bias_act(m4a.reshape(B * h8 * w8, C),
                                self.params["proto_w"], self.params["proto_b"],
                                relu=False, out_dtype=jnp.float32)
        proto = proto.reshape(B, h8, w8, C)
        return proto, m3a, m2a, m1a

    def decoder(self, z, m3, m2, m1):
        # z: (S,h8,w8,256) bf16 -- the 3 stochastic samples are batched here
        p = self.params
        S = z.shape[0]

        def bc(t):
            return jnp.broadcast_to(t, (S,) + t.shape[1:]) if t.shape[0] != S else t

        m3, m2, m1 = bc(m3), bc(m2), bc(m1)
        x = upsample2x(z)
        x = conv3x3(jnp.concatenate([x, m3], axis=-1), p["dec3_w"], p["dec3_b"], relu=True)
        x = upsample2x(x)
        x = conv3x3(jnp.concatenate([x, m2], axis=-1), p["dec2_w"], p["dec2_b"], relu=True)
        x = upsample2x(x)
        x = conv3x3(jnp.concatenate([x, m1], axis=-1), p["dec1_w"], p["dec1_b"], relu=True)
        x = conv3x3(x, p["out_w"], p["out_b"], relu=False, out_dtype=jnp.float32)
        return x  # (S, H, W, 128) f32; real output channels are [..., :3]

    # ------------------------------------------------------------- forward
    def forward(self, datas, num_pred, mode, feat_proto=None, feat_proto_avg=None,
                feat_proto_p=None, Q_require_back=False, rng=None):
        if mode == "S_n":
            feat_proto_all = []
            data_s = self.prep_data(datas[0][0])
            imgs_s = jnp.concatenate([self._prep_img(f) for f in data_s[:num_pred]], axis=0)
            feats = self.encoder(imgs_s)
            proto_s, _, _, _ = self.prototype(feats)
            feat_proto_all.append(proto_s)
            return feat_proto_all, proto_s

        elif mode == "S_p":
            assert feat_proto is not None
            feat_proto_p = []
            data_s = self.prep_data(datas[0][0])
            imgs_s = jnp.concatenate([self._prep_img(f) for f in data_s[:num_pred]], axis=0)
            feats = self.encoder(imgs_s)
            proto_s, _, _, _ = self.prototype(feats)
            feat_proto_p.append(proto_s)
            return feat_proto_p

        elif mode == "q":
            assert feat_proto_avg is not None
            if len(datas) == 1:
                datas = datas[0][0]
            if rng is None:
                rng = jax.random.PRNGKey(0)
            datas = self.prep_data(datas)

            # Encode every frame ONCE; sliding windows reuse the shared features.
            imgs_all = jnp.concatenate([self._prep_img(f) for f in datas], axis=0)
            m4_all, m3_all, m2_all, m1_all = self.encoder(imgs_all)

            feat_proto_ = feat_proto[0]                               # (1,h8,w8,256) f32
            B, h8, w8, C = feat_proto_.shape
            proto_sub = jnp.transpose(feat_proto_[0], (2, 0, 1)).reshape(C, h8 * w8)

            dists, gt_preds, gt = [], [], []
            for idx in range(len(datas) - num_pred):
                gt_q = datas[idx + num_pred]                          # raw NCHW frame
                sl = slice(idx, idx + num_pred)
                proto_q, m3q, m2q, m1q = self.prototype(
                    (m4_all[sl], m3_all[sl], m2_all[sl], m1_all[sl]))

                # 3 stochastic latents: fused mean/std + scale-shift, one launch
                k = jax.random.fold_in(rng, idx)
                noise = jax.random.normal(k, (3, C, h8 * w8), jnp.float32)
                lat = sample_latents(proto_sub, noise)                # (3,C,HW)
                z = jnp.transpose(lat.reshape(3, C, h8, w8),
                                  (0, 2, 3, 1)).astype(jnp.bfloat16)  # (3,h8,w8,C)

                dec = self.decoder(z, m3q, m2q, m1q)                  # batched samples
                pred = jnp.mean(dec[:, :, :, :3], axis=0, keepdims=True)
                gt_preds.append(nhwc_to_nchw(pred))
                gt.append(gt_q)
                dists.append(mse(feat_proto_, proto_q))
            return gt_preds, gt, dists

        else:
            raise ValueError("Mode type error")


# -----------------------------------------------------------------------------
if __name__ == "__main__":
    key = jax.random.PRNGKey(0)
    k_param, k_data, k_rng = jax.random.split(key, 3)

    net = VADNetPallas(k_param)

    H = W = 16
    num_pred = 3
    T = 4  # num_pred support frames + 1 query frame
    frames = [
        jax.random.normal(jax.random.fold_in(k_data, t), (1, 3, H, W), jnp.float32)
        for t in range(T)
    ]
    datas = [[frames]]  # matches the datas[0][0] access pattern in VADNet

    # mode 'S_n' : build the prototype feature bank
    feat_proto_all, proto_s = net.forward(datas, num_pred, "S_n")
    # mode 'S_p' : prototype from (here, the same) support set
    feat_proto_p = net.forward(datas, num_pred, "S_p", feat_proto=feat_proto_all)
    # mode 'q'   : prediction + prototype distance for the query frame
    gt_preds, gt, dists = net.forward(
        datas, num_pred, "q",
        feat_proto=feat_proto_all, feat_proto_avg=proto_s, rng=k_rng)

    jax.block_until_ready((proto_s, feat_proto_p[0], gt_preds[0], dists[0]))

    assert proto_s.shape == (1, H // 8, W // 8, 256)
    assert gt_preds[0].shape == (1, 3, H, W)
    assert bool(jnp.isfinite(dists[0]))
    print("KERNEL_OK")
</pallas_src>

<mosaic_0001>
module attributes {stable_mosaic.version = 11 : i64} {
  func.func @_conv3x3_kernel(%arg0: i32, %arg1: memref<1x288x128xbf16, #tpu.memory_space<vmem>>, %arg2: memref<1x288x128xbf16, #tpu.memory_space<vmem>>, %arg3: memref<1x288x128xbf16, #tpu.memory_space<vmem>>, %arg4: memref<1152x128xbf16, #tpu.memory_space<vmem>>, %arg5: memref<1x128xf32, #tpu.memory_space<vmem>>, %arg6: memref<1x256x128xbf16, #tpu.memory_space<vmem>>) attributes {dimension_semantics = [#tpu.dimension_semantics<parallel>], iteration_bounds = array<i64: 3>, scalar_prefetch = 0 : i64, scratch_operands = 0 : i64, tpu.core_type = #tpu.core_type<tc>, window_params = [{transform_indices = @transform_0, window_bounds = array<i64: 1, 288, 128>}, {transform_indices = @transform_1, window_bounds = array<i64: 1, 288, 128>}, {transform_indices = @transform_2, window_bounds = array<i64: 1, 288, 128>}, {pipeline_mode = #tpu.pipeline_mode<synchronous>, transform_indices = @transform_3, window_bounds = array<i64: 1152, 128>}, {pipeline_mode = #tpu.pipeline_mode<synchronous>, transform_indices = @transform_4, window_bounds = array<i64: 1, 128>}, {transform_indices = @transform_5, window_bounds = array<i64: 1, 256, 128>}]} {
    %c0 = arith.constant 0 : index
    %c0_0 = arith.constant 0 : index
    %c0_1 = arith.constant 0 : index
    %0 = vector.load %arg1[%c0, %c0_0, %c0_1] : memref<1x288x128xbf16, #tpu.memory_space<vmem>>, vector<1x256x128xbf16>
    %1 = vector.shape_cast %0 : vector<1x256x128xbf16> to vector<256x128xbf16>
    %c0_2 = arith.constant 0 : index
    %c0_3 = arith.constant 0 : index
    %2 = vector.load %arg4[%c0_2, %c0_3] : memref<1152x128xbf16, #tpu.memory_space<vmem>>, vector<128x128xbf16>
    %cst = arith.constant dense<0.000000e+00> : vector<256x128xf32>
    %3 = tpu.matmul %1, %2, %cst {dimension_numbers = #tpu.dot_dimension_numbers<[1], [0], [0], [1], [0, 0, 1, 1], [], []>} : vector<256x128xbf16>, vector<128x128xbf16>, vector<256x128xf32> -> vector<256x128xf32>
    %c0_4 = arith.constant 0 : index
    %c0_5 = arith.constant 0 : index
    %c0_6 = arith.constant 0 : index
    %4 = vector.load %arg2[%c0_4, %c0_5, %c0_6] : memref<1x288x128xbf16, #tpu.memory_space<vmem>>, vector<1x256x128xbf16>
    %5 = vector.shape_cast %4 : vector<1x256x128xbf16> to vector<256x128xbf16>
    %c128 = arith.constant 128 : index
    %c0_7 = arith.constant 0 : index
    %6 = vector.load %arg4[%c128, %c0_7] : memref<1152x128xbf16, #tpu.memory_space<vmem>>, vector<128x128xbf16>
    %cst_8 = arith.constant dense<0.000000e+00> : vector<256x128xf32>
    %7 = tpu.matmul %5, %6, %cst_8 {dimension_numbers = #tpu.dot_dimension_numbers<[1], [0], [0], [1], [0, 0, 1, 1], [], []>} : vector<256x128xbf16>, vector<128x128xbf16>, vector<256x128xf32> -> vector<256x128xf32>
    %8 = arith.addf %3, %7 : vector<256x128xf32>
    %c0_9 = arith.constant 0 : index
    %c0_10 = arith.constant 0 : index
    %c0_11 = arith.constant 0 : index
    %9 = vector.load %arg3[%c0_9, %c0_10, %c0_11] : memref<1x288x128xbf16, #tpu.memory_space<vmem>>, vector<1x256x128xbf16>
    %10 = vector.shape_cast %9 : vector<1x256x128xbf16> to vector<256x128xbf16>
    %c256 = arith.constant 256 : index
    %c0_12 = arith.constant 0 : index
    %11 = vector.load %arg4[%c256, %c0_12] : memref<1152x128xbf16, #tpu.memory_space<vmem>>, vector<128x128xbf16>
    %cst_13 = arith.constant dense<0.000000e+00> : vector<256x128xf32>
    %12 = tpu.matmul %10, %11, %cst_13 {dimension_numbers = #tpu.dot_dimension_numbers<[1], [0], [0], [1], [0, 0, 1, 1], [], []>} : vector<256x128xbf16>, vector<128x128xbf16>, vector<256x128xf32> -> vector<256x128xf32>
    %13 = arith.addf %8, %12 : vector<256x128xf32>
    %c0_14 = arith.constant 0 : index
    %c16 = arith.constant 16 : index
    %c0_15 = arith.constant 0 : index
    %14 = vector.load %arg1[%c0_14, %c16, %c0_15] : memref<1x288x128xbf16, #tpu.memory_space<vmem>>, vector<1x256x128xbf16>
    %15 = vector.shape_cast %14 : vector<1x256x128xbf16> to vector<256x128xbf16>
    %c384 = arith.constant 384 : index
    %c0_16 = arith.constant 0 : index
    %16 = vector.load %arg4[%c384, %c0_16] : memref<1152x128xbf16, #tpu.memory_space<vmem>>, vector<128x128xbf16>
    %cst_17 = arith.constant dense<0.000000e+00> : vector<256x128xf32>
    %17 = tpu.matmul %15, %16, %cst_17 {dimension_numbers = #tpu.dot_dimension_numbers<[1], [0], [0], [1], [0, 0, 1, 1], [], []>} : vector<256x128xbf16>, vector<128x128xbf16>, vector<256x128xf32> -> vector<256x128xf32>
    %18 = arith.addf %13, %17 : vector<256x128xf32>
    %c0_18 = arith.constant 0 : index
    %c16_19 = arith.constant 16 : index
    %c0_20 = arith.constant 0 : index
    %19 = vector.load %arg2[%c0_18, %c16_19, %c0_20] : memref<1x288x128xbf16, #tpu.memory_space<vmem>>, vector<1x256x128xbf16>
    %20 = vector.shape_cast %19 : vector<1x256x128xbf16> to vector<256x128xbf16>
    %c512 = arith.constant 512 : index
    %c0_21 = arith.constant 0 : index
    %21 = vector.load %arg4[%c512, %c0_21] : memref<1152x128xbf16, #tpu.memory_space<vmem>>, vector<128x128xbf16>
    %cst_22 = arith.constant dense<0.000000e+00> : vector<256x128xf32>
    %22 = tpu.matmul %20, %21, %cst_22 {dimension_numbers = #tpu.dot_dimension_numbers<[1], [0], [0], [1], [0, 0, 1, 1], [], []>} : vector<256x128xbf16>, vector<128x128xbf16>, vector<256x128xf32> -> vector<256x128xf32>
    %23 = arith.addf %18, %22 : vector<256x128xf32>
    %c0_23 = arith.constant 0 : index
    %c16_24 = arith.constant 16 : index
    %c0_25 = arith.constant 0 : index
    %24 = vector.load %arg3[%c0_23, %c16_24, %c0_25] : memref<1x288x128xbf16, #tpu.memory_space<vmem>>, vector<1x256x128xbf16>
    %25 = vector.shape_cast %24 : vector<1x256x128xbf16> to vector<256x128xbf16>
    %c640 = arith.constant 640 : index
    %c0_26 = arith.constant 0 : index
    %26 = vector.load %arg4[%c640, %c0_26] : memref<1152x128xbf16, #tpu.memory_space<vmem>>, vector<128x128xbf16>
    %cst_27 = arith.constant dense<0.000000e+00> : vector<256x128xf32>
    %27 = tpu.matmul %25, %26, %cst_27 {dimension_numbers = #tpu.dot_dimension_numbers<[1], [0], [0], [1], [0, 0, 1, 1], [], []>} : vector<256x128xbf16>, vector<128x128xbf16>, vector<256x128xf32> -> vector<256x128xf32>
    %28 = arith.addf %23, %27 : vector<256x128xf32>
    %c0_28 = arith.constant 0 : index
    %c32 = arith.constant 32 : index
    %c0_29 = arith.constant 0 : index
    %29 = vector.load %arg1[%c0_28, %c32, %c0_29] : memref<1x288x128xbf16, #tpu.memory_space<vmem>>, vector<1x256x128xbf16>
    %30 = vector.shape_cast %29 : vector<1x256x128xbf16> to vector<256x128xbf16>
    %c768 = arith.constant 768 : index
    %c0_30 = arith.constant 0 : index
    %31 = vector.load %arg4[%c768, %c0_30] : memref<1152x128xbf16, #tpu.memory_space<vmem>>, vector<128x128xbf16>
    %cst_31 = arith.constant dense<0.000000e+00> : vector<256x128xf32>
    %32 = tpu.matmul %30, %31, %cst_31 {dimension_numbers = #tpu.dot_dimension_numbers<[1], [0], [0], [1], [0, 0, 1, 1], [], []>} : vector<256x128xbf16>, vector<128x128xbf16>, vector<256x128xf32> -> vector<256x128xf32>
    %33 = arith.addf %28, %32 : vector<256x128xf32>
    %c0_32 = arith.constant 0 : index
    %c32_33 = arith.constant 32 : index
    %c0_34 = arith.constant 0 : index
    %34 = vector.load %arg2[%c0_32, %c32_33, %c0_34] : memref<1x288x128xbf16, #tpu.memory_space<vmem>>, vector<1x256x128xbf16>
    %35 = vector.shape_cast %34 : vector<1x256x128xbf16> to vector<256x128xbf16>
    %c896 = arith.constant 896 : index
    %c0_35 = arith.constant 0 : index
    %36 = vector.load %arg4[%c896, %c0_35] : memref<1152x128xbf16, #tpu.memory_space<vmem>>, vector<128x128xbf16>
    %cst_36 = arith.constant dense<0.000000e+00> : vector<256x128xf32>
    %37 = tpu.matmul %35, %36, %cst_36 {dimension_numbers = #tpu.dot_dimension_numbers<[1], [0], [0], [1], [0, 0, 1, 1], [], []>} : vector<256x128xbf16>, vector<128x128xbf16>, vector<256x128xf32> -> vector<256x128xf32>
    %38 = arith.addf %33, %37 : vector<256x128xf32>
    %c0_37 = arith.constant 0 : index
    %c32_38 = arith.constant 32 : index
    %c0_39 = arith.constant 0 : index
    %39 = vector.load %arg3[%c0_37, %c32_38, %c0_39] : memref<1x288x128xbf16, #tpu.memory_space<vmem>>, vector<1x256x128xbf16>
    %40 = vector.shape_cast %39 : vector<1x256x128xbf16> to vector<256x128xbf16>
    %c1024 = arith.constant 1024 : index
    %c0_40 = arith.constant 0 : index
    %41 = vector.load %arg4[%c1024, %c0_40] : memref<1152x128xbf16, #tpu.memory_space<vmem>>, vector<128x128xbf16>
    %cst_41 = arith.constant dense<0.000000e+00> : vector<256x128xf32>
    %42 = tpu.matmul %40, %41, %cst_41 {dimension_numbers = #tpu.dot_dimension_numbers<[1], [0], [0], [1], [0, 0, 1, 1], [], []>} : vector<256x128xbf16>, vector<128x128xbf16>, vector<256x128xf32> -> vector<256x128xf32>
    %43 = arith.addf %38, %42 : vector<256x128xf32>
    %c0_42 = arith.constant 0 : index
    %c0_43 = arith.constant 0 : index
    %44 = vector.load %arg5[%c0_42, %c0_43] : memref<1x128xf32, #tpu.memory_space<vmem>>, vector<1x128xf32>
    %45 = vector.broadcast %44 : vector<1x128xf32> to vector<256x128xf32>
    %46 = arith.addf %43, %45 : vector<256x128xf32>
    %cst_44 = arith.constant 0.000000e+00 : f32
    %47 = vector.broadcast %cst_44 : f32 to vector<256x128xf32>
    %48 = arith.maximumf %46, %47 : vector<256x128xf32>
    %49 = arith.truncf %48 : vector<256x128xf32> to vector<256x128xbf16>
    %c0_45 = arith.constant 0 : index
    %c0_46 = arith.constant 0 : index
    %c0_47 = arith.constant 0 : index
    %50 = vector.load %arg6[%c0_45, %c0_46, %c0_47] : memref<1x256x128xbf16, #tpu.memory_space<vmem>>, vector<1x256x128xbf16>
    %51 = vector.shape_cast %50 : vector<1x256x128xbf16> to vector<256x128xbf16>
    %52 = vector.shape_cast %49 : vector<256x128xbf16> to vector<1x256x128xbf16>
    tpu.vector_store %arg6[%c0_45, %c0_46, %c0_47], %52 {strides = array<i32>} : memref<1x256x128xbf16, #tpu.memory_space<vmem>>, vector<1x256x128xbf16>,
    return
  }
  func.func @transform_0(%arg0: i32) -> (i32, i32, i32) {
    %c0_i32 = arith.constant 0 : i32
    %c0_i32_0 = arith.constant 0 : i32
    %c0_i32_1 = arith.constant 0 : i32
    return %arg0, %c0_i32, %c0_i32_0 : i32, i32, i32
  }
  func.func @transform_1(%arg0: i32) -> (i32, i32, i32) {
    %c0_i32 = arith.constant 0 : i32
    %c0_i32_0 = arith.constant 0 : i32
    %c0_i32_1 = arith.constant 0 : i32
    return %arg0, %c0_i32, %c0_i32_0 : i32, i32, i32
  }
  func.func @transform_2(%arg0: i32) -> (i32, i32, i32) {
    %c0_i32 = arith.constant 0 : i32
    %c0_i32_0 = arith.constant 0 : i32
    %c0_i32_1 = arith.constant 0 : i32
    return %arg0, %c0_i32, %c0_i32_0 : i32, i32, i32
  }
  func.func @transform_3(%arg0: i32) -> (i32, i32) {
    %c0_i32 = arith.constant 0 : i32
    %c0_i32_0 = arith.constant 0 : i32
    %c0_i32_1 = arith.constant 0 : i32
    return %c0_i32, %c0_i32_0 : i32, i32
  }
  func.func @transform_4(%arg0: i32) -> (i32, i32) {
    %c0_i32 = arith.constant 0 : i32
    %c0_i32_0 = arith.constant 0 : i32
    %c0_i32_1 = arith.constant 0 : i32
    return %c0_i32, %c0_i32_0 : i32, i32
  }
  func.func @transform_5(%arg0: i32) -> (i32, i32, i32) {
    %c0_i32 = arith.constant 0 : i32
    %c0_i32_0 = arith.constant 0 : i32
    %c0_i32_1 = arith.constant 0 : i32
    return %arg0, %c0_i32, %c0_i32_0 : i32, i32, i32
  }
}

</mosaic_0001>

<llo_original>
// kernel: tpu_custom_call.1
$region0: #{tpu_custom_call.1}
  #allocation0 [shape = 'u32[]', space=smem, size = 0x4, offset = 0x4, fixed_abs, tag = 'smem constant byte address 0x4 - core index']
  #allocation1 [shape = 'u32[72,128]{1,0:T(1,128)}', space=vmem, size = 0x9000, scoped, tag = 'internal scratch']
  %s0 = inlined_call_operand.hbm [shape: bf16[3,288,128], index: 0, kind: input, shape index: {}]
  %s1 = inlined_call_operand.hbm [shape: bf16[3,288,128], index: 1, kind: input, shape index: {}]
  %s2 = inlined_call_operand.hbm [shape: bf16[3,288,128], index: 2, kind: input, shape index: {}]
  %s3 = inlined_call_operand.hbm [shape: bf16[1152,128], index: 3, kind: input, shape index: {}]
  %s4 = inlined_call_operand.vmem [shape: f32[1,128], index: 4, kind: input, shape index: {}]
  %s5 = inlined_call_operand.hbm [shape: bf16[3,256,128], index: 5, kind: output, shape index: {}]
  %s6 = sld [smem:[#allocation0]]
  $region69: #{tpu_custom_call.1} parent=0
    _
  %s8 = ssub.s32 1, %s6
  %s9 = scalar_select 0, %s8, %s6
  $region1: #{tpu_custom_call.1} parent=0
    #allocation2 [shape = 'u8[147456]{0}', space=vmem, size = 0x24000, scoped, tag = 'input window, operand 0']
    #allocation3 [shape = 's32[2]{0}', space=sflag, size = 0x8, scoped, tag = 'scoped memory for tpu_custom_call.1']
    #allocation4 [shape = 's32[2]{0}', space=sflag, size = 0x8, scoped, tag = 'scoped memory for tpu_custom_call.1']
    #allocation5 [shape = 'u8[147456]{0}', space=vmem, size = 0x24000, scoped, tag = 'input window, operand 1']
    #allocation6 [shape = 's32[2]{0}', space=sflag, size = 0x8, scoped, tag = 'scoped memory for tpu_custom_call.1']
    #allocation7 [shape = 'u8[147456]{0}', space=vmem, size = 0x24000, scoped, tag = 'input window, operand 2']
    #allocation8 [shape = 'u8[294912]{0}', space=vmem, size = 0x48000, scoped, tag = 'input window, operand 3, single buffered']
    #allocation9 [shape = 's32[1]{0}', space=sflag, size = 0x4, scoped, tag = 'scoped memory for tpu_custom_call.1']
    #allocation10 [shape = 'u8[131072]{0}', space=vmem, size = 0x20000, scoped, tag = 'output window, operand 0']
    %10 = vsyncpa [#allocation3], 0
    %s11 = scalar_lea.sflag [#allocation3], 1
    %12 = vsyncpa %s11, 0
    %13 = vsyncpa [#allocation6], 0
    %s14 = scalar_lea.sflag [#allocation6], 1
    %15 = vsyncpa %s14, 0
    %16 = vsyncpa [#allocation9], 0
    %17 = vsyncpa [#allocation4], 0
    %s18 = scalar_lea.sflag [#allocation4], 1
    %19 = vsyncpa %s18, 0
    loop: start=0, step=1, limit=5
    $region2: #{tpu_custom_call.1} parent=1 // loop_pre_header
      _
    $region3: #{tpu_custom_call.1} parent=1 // loop_header
      %s21 = sphi 0, %s25
      %p22 = scmp.ge.s32.totalorder %s21, 5
      %s31 = sphi 0, %s33
      %s34 = sphi 0, %s31
      %s35 = sphi 0, %s34
      %s51 = sphi 0, %s35
      %s57 = sphi 0, %s59
      %s60 = sphi 0, %s57
      %s61 = sphi 0, %s60
      %s77 = sphi 0, %s61
      %s83 = sphi 0, %s85
      %s86 = sphi 0, %s83
      %s87 = sphi 0, %s86
      %s103 = sphi 0, %s87
      %s107 = sphi 0, %s107
      %s109 = sphi 0, %s107
      %s110 = sphi 0, %s109
      %s124 = sphi 0, %s110
      %s128 = sphi 0, %s128
      %s130 = sphi 0, %s128
      %s131 = sphi 0, %s130
      %s145 = sphi 0, %s131
      %s151 = sphi 0, %s153
      %s154 = sphi 0, %s151
      %s155 = sphi 0, %s154
      %s171 = sphi 0, %s155
    $region4: #{tpu_custom_call.1} parent=1 // loop_header_branch
      %24 = sbr.rel (%p22) target = $region8
    $region5: #{tpu_custom_call.1} parent=1 // loop_body
      %s26 = ssub.s32 %s21, 1
      %s27 = ssub.s32 %s21, 2
      %s28 = sadd.s32 %s21, 1
      %s29 = ssub.s32 %s21, %s28
      %p30 = scmp.eq.s32.totalorder %s29, 0
      %s32 = sadd.s32 %s31, 1
      %s33 = scalar_select %p30, %s31, %s32
      %p36 = pneg %p30
      %p37 = scmp.eq.s32.totalorder %s21, 2
      %p38 = por %p36, %p37
      %p39 = scmp.ne.s32.totalorder %s31, %s34
      %p40 = scmp.eq.s32.totalorder %s21, 0
      %p41 = por %p39, %p40
      %p42 = scmp.ne.s32.totalorder %s31, %s34
      %p43 = scmp.eq.s32.totalorder %s26, 2
      %p44 = por %p42, %p43
      %p45 = scmp.ne.s32.totalorder %s34, %s35
      %p46 = scmp.eq.s32.totalorder %s26, 0
      %p47 = por %p45, %p46
      %p48 = scmp.ne.s32.totalorder %s34, %s35
      %p49 = scmp.eq.s32.totalorder %s27, 2
      %p50 = por %p48, %p49
      %p52 = scmp.ne.s32.totalorder %s35, %s51
      %p53 = scmp.eq.s32.totalorder %s27, 0
      %p54 = por %p52, %p53
      %s55 = ssub.s32 %s21, %s28
      %p56 = scmp.eq.s32.totalorder %s55, 0
      %s58 = sadd.s32 %s57, 1
      %s59 = scalar_select %p56, %s57, %s58
      %p62 = pneg %p56
      %p63 = scmp.eq.s32.totalorder %s21, 2
      %p64 = por %p62, %p63
      %p65 = scmp.ne.s32.totalorder %s57, %s60
      %p66 = scmp.eq.s32.totalorder %s21, 0
      %p67 = por %p65, %p66
      %p68 = scmp.ne.s32.totalorder %s57, %s60
      %p69 = scmp.eq.s32.totalorder %s26, 2
      %p70 = por %p68, %p69
      %p71 = scmp.ne.s32.totalorder %s60, %s61
      %p72 = scmp.eq.s32.totalorder %s26, 0
      %p73 = por %p71, %p72
      %p74 = scmp.ne.s32.totalorder %s60, %s61
      %p75 = scmp.eq.s32.totalorder %s27, 2
      %p76 = por %p74, %p75
      %p78 = scmp.ne.s32.totalorder %s61, %s77
      %p79 = scmp.eq.s32.totalorder %s27, 0
      %p80 = por %p78, %p79
      %s81 = ssub.s32 %s21, %s28
      %p82 = scmp.eq.s32.totalorder %s81, 0
      %s84 = sadd.s32 %s83, 1
      %s85 = scalar_select %p82, %s83, %s84
      %p88 = pneg %p82
      %p89 = scmp.eq.s32.totalorder %s21, 2
      %p90 = por %p88, %p89
      %p91 = scmp.ne.s32.totalorder %s83, %s86
      %p92 = scmp.eq.s32.totalorder %s21, 0
      %p93 = por %p91, %p92
      %p94 = scmp.ne.s32.totalorder %s83, %s86
      %p95 = scmp.eq.s32.totalorder %s26, 2
      %p96 = por %p94, %p95
      %p97 = scmp.ne.s32.totalorder %s86, %s87
      %p98 = scmp.eq.s32.totalorder %s26, 0
      %p99 = por %p97, %p98
      %p100 = scmp.ne.s32.totalorder %s86, %s87
      %p101 = scmp.eq.s32.totalorder %s27, 2
      %p102 = por %p100, %p101
      %p104 = scmp.ne.s32.totalorder %s87, %s103
      %p105 = scmp.eq.s32.totalorder %s27, 0
      %p106 = por %p104, %p105
      %s108 = sadd.s32 %s107, 1
      %p111 = scmp.eq.s32.totalorder %s21, 2
      %p112 = scmp.ne.s32.totalorder %s107, %s109
      %p113 = scmp.eq.s32.totalorder %s21, 0
      %p114 = por %p112, %p113
      %p115 = scmp.ne.s32.totalorder %s107, %s109
      %p116 = scmp.eq.s32.totalorder %s26, 2
      %p117 = por %p115, %p116
      %p118 = scmp.ne.s32.totalorder %s109, %s110
      %p119 = scmp.eq.s32.totalorder %s26, 0
      %p120 = por %p118, %p119
      %p121 = scmp.ne.s32.totalorder %s109, %s110
      %p122 = scmp.eq.s32.totalorder %s27, 2
      %p123 = por %p121, %p122
      %p125 = scmp.ne.s32.totalorder %s110, %s124
      %p126 = scmp.eq.s32.totalorder %s27, 0
      %p127 = por %p125, %p126
      %s129 = sadd.s32 %s128, 1
      %p132 = scmp.eq.s32.totalorder %s21, 2
      %p133 = scmp.ne.s32.totalorder %s128, %s130
      %p134 = scmp.eq.s32.totalorder %s21, 0
      %p135 = por %p133, %p134
      %p136 = scmp.ne.s32.totalorder %s128, %s130
      %p137 = scmp.eq.s32.totalorder %s26, 2
      %p138 = por %p136, %p137
      %p139 = scmp.ne.s32.totalorder %s130, %s131
      %p140 = scmp.eq.s32.totalorder %s26, 0
      %p141 = por %p139, %p140
      %p142 = scmp.ne.s32.totalorder %s130, %s131
      %p143 = scmp.eq.s32.totalorder %s27, 2
      %p144 = por %p142, %p143
      %p146 = scmp.ne.s32.totalorder %s131, %s145
      %p147 = scmp.eq.s32.totalorder %s27, 0
      %p148 = por %p146, %p147
      %s149 = ssub.s32 %s21, %s28
      %p150 = scmp.eq.s32.totalorder %s149, 0
      %s152 = sadd.s32 %s151, 1
      %s153 = scalar_select %p150, %s151, %s152
      %p156 = pneg %p150
      %p157 = scmp.eq.s32.totalorder %s21, 2
      %p158 = por %p156, %p157
      %p159 = scmp.ne.s32.totalorder %s151, %s154
      %p160 = scmp.eq.s32.totalorder %s21, 0
      %p161 = por %p159, %p160
      %p162 = scmp.ne.s32.totalorder %s151, %s154
      %p163 = scmp.eq.s32.totalorder %s26, 2
      %p164 = por %p162, %p163
      %p165 = scmp.ne.s32.totalorder %s154, %s155
      %p166 = scmp.eq.s32.totalorder %s26, 0
      %p167 = por %p165, %p166
      %p168 = scmp.ne.s32.totalorder %s154, %s155
      %p169 = scmp.eq.s32.totalorder %s27, 2
      %p170 = por %p168, %p169
      %p172 = scmp.ne.s32.totalorder %s155, %s171
      %p173 = scmp.eq.s32.totalorder %s27, 0
      %p174 = por %p172, %p173
      %p175 = scmp.le.s32.totalorder 1, %s21
      %p176 = scmp.lt.s32.totalorder %s21, 4
      %p177 = pnand %p175, %p176
      %p178 = pneg %p177
      // Predicated region
      $region9: #{tpu_custom_call.1} parent=5 // pred_check
        _
      $region10: #{tpu_custom_call.1} parent=5 // pred_check_branch
        %180 = sbr.rel (%p177) target = $region12
      $region11: #{tpu_custom_call.1} parent=5 // pred_region
        %s181 = ssub.s32 %s21, 1
        // Predicated region
        $region13: #{tpu_custom_call.1} parent=11 // pred_check
          %p182 = pneg %p120
        $region14: #{tpu_custom_call.1} parent=11 // pred_check_branch
          %184 = sbr.rel (%p182) target = $region16
        $region15: #{tpu_custom_call.1} parent=11 // pred_region
          %186 = vsyncadd [#allocation9], 0
          %s187 = sshll.u32 %s3, 4
          %s188 = int_to_ptr.hbm [resolvable:$true] %s187
          %s189 = sshll.u32 [#allocation8], 4
          %s190 = int_to_ptr.vmem [resolvable:$true] %s189
          %195 = dma.hbm_to_vmem [thread:$0]  %s188, 9216, %s190, [#allocation9], 64, 64, 4
        $region16: #{tpu_custom_call.1} parent=11 // pred_fallthru
          _
        // Predicated region
        $region17: #{tpu_custom_call.1} parent=11 // pred_check
          %p196 = pneg %p141
        $region18: #{tpu_custom_call.1} parent=11 // pred_check_branch
          %198 = sbr.rel (%p196) target = $region20
        $region19: #{tpu_custom_call.1} parent=11 // pred_region
          _
        $region20: #{tpu_custom_call.1} parent=11 // pred_fallthru
          _
      $region12: #{tpu_custom_call.1} parent=5 // pred_fallthru
        _
      %p199 = scmp.lt.s32.totalorder %s21, 3
      // Predicated region
      $region21: #{tpu_custom_call.1} parent=5 // pred_check
        %p200 = pneg %p199
      $region22: #{tpu_custom_call.1} parent=5 // pred_check_branch
        %202 = sbr.rel (%p200) target = $region24
      $region23: #{tpu_custom_call.1} parent=5 // pred_region
        // Predicated region
        $region25: #{tpu_custom_call.1} parent=23 // pred_check
          %p203 = pneg %p41
        $region26: #{tpu_custom_call.1} parent=23 // pred_check_branch
          %205 = sbr.rel (%p203) target = $region28
        $region27: #{tpu_custom_call.1} parent=23 // pred_region
          %s206 = sand.u32 %s31, 1
          %s207 = scalar_lea.sflag [#allocation3], %s206
          %s208 = sand.u32 %s31, 1
          %s209 = smul.addr %s208, 144
          %s210 = scalar_lea.vmem [#allocation2], %s209
          %212 = vsyncadd %s207, 0
          %s213 = smul.addr %s21, 36
          %s214 = smul.addr %s213, 4
          %s215 = scalar_lea.hbm %s0, %s214
          %s216 = sshll.u32 %s215, 4
          %s217 = int_to_ptr.hbm [resolvable:$true] %s216
          %s218 = sshll.u32 %s210, 4
          %s219 = int_to_ptr.vmem [resolvable:$true] %s218
          %224 = dma.hbm_to_vmem [thread:$0]  %s217, 2304, %s219, %s207, 64, 64, 4
        $region28: #{tpu_custom_call.1} parent=23 // pred_fallthru
          _
        // Predicated region
        $region29: #{tpu_custom_call.1} parent=23 // pred_check
          %p225 = pneg %p67
        $region30: #{tpu_custom_call.1} parent=23 // pred_check_branch
          %227 = sbr.rel (%p225) target = $region32
        $region31: #{tpu_custom_call.1} parent=23 // pred_region
          %s228 = sand.u32 %s21, 1
          %s229 = scalar_lea.sflag [#allocation6], %s228
          %s230 = sand.u32 %s57, 1
          %s231 = smul.addr %s230, 144
          %s232 = scalar_lea.vmem [#allocation5], %s231
          %234 = vsyncadd %s229, 0
          %s235 = smul.addr %s21, 36
          %s236 = smul.addr %s235, 4
          %s237 = scalar_lea.hbm %s1, %s236
          %s238 = sshll.u32 %s237, 4
          %s239 = int_to_ptr.hbm [resolvable:$true] %s238
          %s240 = sshll.u32 %s232, 4
          %s241 = int_to_ptr.vmem [resolvable:$true] %s240
          %246 = dma.hbm_to_vmem [thread:$0]  %s239, 2304, %s241, %s229, 64, 64, 4
        $region32: #{tpu_custom_call.1} parent=23 // pred_fallthru
          _
        // Predicated region
        $region33: #{tpu_custom_call.1} parent=23 // pred_check
          %p247 = pneg %p93
        $region34: #{tpu_custom_call.1} parent=23 // pred_check_branch
          %249 = sbr.rel (%p247) target = $region36
        $region35: #{tpu_custom_call.1} parent=23 // pred_region
          %s250 = sand.u32 %s21, 1
          %s251 = scalar_lea.sflag [#allocation6], %s250
          %s252 = sand.u32 %s83, 1
          %s253 = smul.addr %s252, 144
          %s254 = scalar_lea.vmem [#allocation7], %s253
          %256 = vsyncadd %s251, 0
          %s257 = smul.addr %s21, 36
          %s258 = smul.addr %s257, 4
          %s259 = scalar_lea.hbm %s2, %s258
          %s260 = sshll.u32 %s259, 4
          %s261 = int_to_ptr.hbm [resolvable:$true] %s260
          %s262 = sshll.u32 %s254, 4
          %s263 = int_to_ptr.vmem [resolvable:$true] %s262
          %268 = dma.hbm_to_vmem [thread:$0]  %s261, 2304, %s263, %s251, 64, 64, 4
        $region36: #{tpu_custom_call.1} parent=23 // pred_fallthru
          _
      $region24: #{tpu_custom_call.1} parent=5 // pred_fallthru
        _
      %p269 = scmp.le.s32.totalorder 1, %s21
      %p270 = scmp.lt.s32.totalorder %s21, 4
      %p271 = pnand %p269, %p270
      %p272 = pneg %p271
      // Predicated region
      $region37: #{tpu_custom_call.1} parent=5 // pred_check
        _
      $region38: #{tpu_custom_call.1} parent=5 // pred_check_branch
        %274 = sbr.rel (%p271) target = $region40
      $region39: #{tpu_custom_call.1} parent=5 // pred_region
        %s275 = ssub.s32 %s21, 1
        %s276 = sand.u32 %s34, 1
        %s277 = scalar_lea.sflag [#allocation3], %s276
        %s278 = sand.u32 %s34, 1
        %s279 = smul.addr %s278, 144
        %s280 = scalar_lea.vmem [#allocation2], %s279
        // Predicated region
        $region41: #{tpu_custom_call.1} parent=39 // pred_check
          %p281 = pneg %p47
        $region42: #{tpu_custom_call.1} parent=39 // pred_check_branch
          %283 = sbr.rel (%p281) target = $region44
        $region43: #{tpu_custom_call.1} parent=39 // pred_region
          %285 = dma.done %s277, 2304
        $region44: #{tpu_custom_call.1} parent=39 // pred_fallthru
          _
        %s286 = sand.u32 %s26, 1
        %s287 = scalar_lea.sflag [#allocation6], %s286
        %s288 = sand.u32 %s60, 1
        %s289 = smul.addr %s288, 144
        %s290 = scalar_lea.vmem [#allocation5], %s289
        // Predicated region
        $region45: #{tpu_custom_call.1} parent=39 // pred_check
          %p291 = pneg %p73
        $region46: #{tpu_custom_call.1} parent=39 // pred_check_branch
          %293 = sbr.rel (%p291) target = $region48
        $region47: #{tpu_custom_call.1} parent=39 // pred_region
          %295 = dma.done %s287, 2304
        $region48: #{tpu_custom_call.1} parent=39 // pred_fallthru
          _
        %s296 = sand.u32 %s26, 1
        %s297 = scalar_lea.sflag [#allocation6], %s296
        %s298 = sand.u32 %s86, 1
        %s299 = smul.addr %s298, 144
        %s300 = scalar_lea.vmem [#allocation7], %s299
        // Predicated region
        $region49: #{tpu_custom_call.1} parent=39 // pred_check
          %p301 = pneg %p99
        $region50: #{tpu_custom_call.1} parent=39 // pred_check_branch
          %303 = sbr.rel (%p301) target = $region52
        $region51: #{tpu_custom_call.1} parent=39 // pred_region
          %305 = dma.done %s297, 2304
        $region52: #{tpu_custom_call.1} parent=39 // pred_fallthru
          _
        // Predicated region
        $region53: #{tpu_custom_call.1} parent=39 // pred_check
          %p306 = pneg %p120
        $region54: #{tpu_custom_call.1} parent=39 // pred_check_branch
          %308 = sbr.rel (%p306) target = $region56
        $region55: #{tpu_custom_call.1} parent=39 // pred_region
          %310 = dma.done [#allocation9], 9216
        $region56: #{tpu_custom_call.1} parent=39 // pred_fallthru
          _
        %s311 = sand.u32 %s34, 1
        %s312 = scalar_lea.sflag [#allocation3], %s311
        %s313 = sand.u32 %s34, 1
        %s314 = smul.addr %s313, 144
        %s315 = scalar_lea.vmem [#allocation2], %s314
        %p316 = pneg %p47
        %p317 = pneg %p44
        %s318 = sand.u32 %s26, 1
        %s319 = scalar_lea.sflag [#allocation6], %s318
        %s320 = sand.u32 %s60, 1
        %s321 = smul.addr %s320, 144
        %s322 = scalar_lea.vmem [#allocation5], %s321
        %p323 = pneg %p73
        %p324 = pneg %p70
        %s325 = sand.u32 %s26, 1
        %s326 = scalar_lea.sflag [#allocation6], %s325
        %s327 = sand.u32 %s86, 1
        %s328 = smul.addr %s327, 144
        %s329 = scalar_lea.vmem [#allocation7], %s328
        %p330 = pneg %p99
        %p331 = pneg %p96
        %p332 = pneg %p120
        %p333 = pneg %p117
        %p334 = pneg %p141
        %p335 = pneg %p138
        %p336 = pneg %p167
        %p337 = pneg %p164
        %s338 = sand.u32 %s154, 1
        %s339 = scalar_lea.sflag [#allocation4], %s338
        %s340 = sand.u32 %s154, 1
        %s341 = smul.addr %s340, 128
        %s342 = scalar_lea.vmem [#allocation10], %s341
        %v343 = vld [vmem:[%s280] sm:$0xf]
        %v344 = vld [vmem:[%s280 + $0x4] sm:$0xf]
        %v345 = vld [vmem:[%s280 + $0x8] sm:$0xf]
        %v346 = vld [vmem:[%s280 + $0xc] sm:$0xf]
        %v347 = vld [vmem:[%s280 + $0x10] sm:$0xf]
        %v348 = vld [vmem:[%s280 + $0x14] sm:$0xf]
        %v349 = vld [vmem:[%s280 + $0x18] sm:$0xf]
        %v350 = vld [vmem:[%s280 + $0x1c] sm:$0xf]
        %v351 = vld [vmem:[%s280 + $0x20] sm:$0xf]
        %v352 = vld [vmem:[%s280 + $0x24] sm:$0xf]
        %v353 = vld [vmem:[%s280 + $0x28] sm:$0xf]
        %v354 = vld [vmem:[%s280 + $0x2c] sm:$0xf]
        %v355 = vld [vmem:[%s280 + $0x30] sm:$0xf]
        %v356 = vld [vmem:[%s280 + $0x34] sm:$0xf]
        %v357 = vld [vmem:[%s280 + $0x38] sm:$0xf]
        %v358 = vld [vmem:[%s280 + $0x3c] sm:$0xf]
        %v359 = vld [vmem:[%s280 + $0x40] sm:$0xf]
        %v360 = vld [vmem:[%s280 + $0x44] sm:$0xf]
        %v361 = vld [vmem:[%s280 + $0x48] sm:$0xf]
        %v362 = vld [vmem:[%s280 + $0x4c] sm:$0xf]
        %v363 = vld [vmem:[%s280 + $0x50] sm:$0xf]
        %v364 = vld [vmem:[%s280 + $0x54] sm:$0xf]
        %v365 = vld [vmem:[%s280 + $0x58] sm:$0xf]
        %v366 = vld [vmem:[%s280 + $0x5c] sm:$0xf]
        %v367 = vld [vmem:[%s280 + $0x60] sm:$0xf]
        %v368 = vld [vmem:[%s280 + $0x64] sm:$0xf]
        %v369 = vld [vmem:[%s280 + $0x68] sm:$0xf]
        %v370 = vld [vmem:[%s280 + $0x6c] sm:$0xf]
        %v371 = vld [vmem:[%s280 + $0x70] sm:$0xf]
        %v372 = vld [vmem:[%s280 + $0x74] sm:$0xf]
        %v373 = vld [vmem:[%s280 + $0x78] sm:$0xf]
        %v374 = vld [vmem:[%s280 + $0x7c] sm:$0xf]
        %v375 = vld [vmem:[#allocation8] sm:$0xf]
        %v376 = vld [vmem:[#allocation8 + $0x4] sm:$0xf]
        %v377 = vld [vmem:[#allocation8 + $0x8] sm:$0xf]
        %v378 = vld [vmem:[#allocation8 + $0xc] sm:$0xf]
        %v379 = vld [vmem:[#allocation8 + $0x10] sm:$0xf]
        %v380 = vld [vmem:[#allocation8 + $0x14] sm:$0xf]
        %v381 = vld [vmem:[#allocation8 + $0x18] sm:$0xf]
        %v382 = vld [vmem:[#allocation8 + $0x1c] sm:$0xf]
        %v383 = vld [vmem:[#allocation8 + $0x20] sm:$0xf]
        %v384 = vld [vmem:[#allocation8 + $0x24] sm:$0xf]
        %v385 = vld [vmem:[#allocation8 + $0x28] sm:$0xf]
        %v386 = vld [vmem:[#allocation8 + $0x2c] sm:$0xf]
        %v387 = vld [vmem:[#allocation8 + $0x30] sm:$0xf]
        %v388 = vld [vmem:[#allocation8 + $0x34] sm:$0xf]
        %v389 = vld [vmem:[#allocation8 + $0x38] sm:$0xf]
        %v390 = vld [vmem:[#allocation8 + $0x3c] sm:$0xf]
        %v391 = vld [vmem:[%s290] sm:$0xf]
        %v392 = vld [vmem:[%s290 + $0x4] sm:$0xf]
        %v393 = vld [vmem:[%s290 + $0x8] sm:$0xf]
        %v394 = vld [vmem:[%s290 + $0xc] sm:$0xf]
        %v395 = vld [vmem:[%s290 + $0x10] sm:$0xf]
        %v396 = vld [vmem:[%s290 + $0x14] sm:$0xf]
        %v397 = vld [vmem:[%s290 + $0x18] sm:$0xf]
        %v398 = vld [vmem:[%s290 + $0x1c] sm:$0xf]
        %v399 = vld [vmem:[%s290 + $0x20] sm:$0xf]
        %v400 = vld [vmem:[%s290 + $0x24] sm:$0xf]
        %v401 = vld [vmem:[%s290 + $0x28] sm:$0xf]
        %v402 = vld [vmem:[%s290 + $0x2c] sm:$0xf]
        %v403 = vld [vmem:[%s290 + $0x30] sm:$0xf]
        %v404 = vld [vmem:[%s290 + $0x34] sm:$0xf]
        %v405 = vld [vmem:[%s290 + $0x38] sm:$0xf]
        %v406 = vld [vmem:[%s290 + $0x3c] sm:$0xf]
        %v407 = vld [vmem:[%s290 + $0x40] sm:$0xf]
        %v408 = vld [vmem:[%s290 + $0x44] sm:$0xf]
        %v409 = vld [vmem:[%s290 + $0x48] sm:$0xf]
        %v410 = vld [vmem:[%s290 + $0x4c] sm:$0xf]
        %v411 = vld [vmem:[%s290 + $0x50] sm:$0xf]
        %v412 = vld [vmem:[%s290 + $0x54] sm:$0xf]
        %v413 = vld [vmem:[%s290 + $0x58] sm:$0xf]
        %v414 = vld [vmem:[%s290 + $0x5c] sm:$0xf]
        %v415 = vld [vmem:[%s290 + $0x60] sm:$0xf]
        %v416 = vld [vmem:[%s290 + $0x64] sm:$0xf]
        %v417 = vld [vmem:[%s290 + $0x68] sm:$0xf]
        %v418 = vld [vmem:[%s290 + $0x6c] sm:$0xf]
        %v419 = vld [vmem:[%s290 + $0x70] sm:$0xf]
        %v420 = vld [vmem:[%s290 + $0x74] sm:$0xf]
        %v421 = vld [vmem:[%s290 + $0x78] sm:$0xf]
        %v422 = vld [vmem:[%s290 + $0x7c] sm:$0xf]
        %v423 = vld [vmem:[#allocation8 + $0x40] sm:$0xf]
        %v424 = vld [vmem:[#allocation8 + $0x44] sm:$0xf]
        %v425 = vld [vmem:[#allocation8 + $0x48] sm:$0xf]
        %v426 = vld [vmem:[#allocation8 + $0x4c] sm:$0xf]
        %v427 = vld [vmem:[#allocation8 + $0x50] sm:$0xf]
        %v428 = vld [vmem:[#allocation8 + $0x54] sm:$0xf]
        %v429 = vld [vmem:[#allocation8 + $0x58] sm:$0xf]
        %v430 = vld [vmem:[#allocation8 + $0x5c] sm:$0xf]
        %v431 = vld [vmem:[#allocation8 + $0x60] sm:$0xf]
        %v432 = vld [vmem:[#allocation8 + $0x64] sm:$0xf]
        %v433 = vld [vmem:[#allocation8 + $0x68] sm:$0xf]
        %v434 = vld [vmem:[#allocation8 + $0x6c] sm:$0xf]
        %v435 = vld [vmem:[#allocation8 + $0x70] sm:$0xf]
        %v436 = vld [vmem:[#allocation8 + $0x74] sm:$0xf]
        %v437 = vld [vmem:[#allocation8 + $0x78] sm:$0xf]
        %v438 = vld [vmem:[#allocation8 + $0x7c] sm:$0xf]
        %v471 = vunpack.c.l.b16 %v391
        %v472 = vunpack.c.l.b16 %v392
        %v473 = vunpack.c.l.b16 %v393
        %v474 = vunpack.c.l.b16 %v394
        %v475 = vunpack.c.l.b16 %v395
        %v476 = vunpack.c.l.b16 %v396
        %v477 = vunpack.c.l.b16 %v397
        %v478 = vunpack.c.l.b16 %v398
        %v479 = vunpack.c.l.b16 %v399
        %v480 = vunpack.c.l.b16 %v400
        %v481 = vunpack.c.l.b16 %v401
        %v482 = vunpack.c.l.b16 %v402
        %v483 = vunpack.c.l.b16 %v403
        %v484 = vunpack.c.l.b16 %v404
        %v485 = vunpack.c.l.b16 %v405
        %v486 = vunpack.c.l.b16 %v406
        %v487 = vunpack.c.l.b16 %v407
        %v488 = vunpack.c.l.b16 %v408
        %v489 = vunpack.c.l.b16 %v409
        %v490 = vunpack.c.l.b16 %v410
        %v491 = vunpack.c.l.b16 %v411
        %v492 = vunpack.c.l.b16 %v412
        %v493 = vunpack.c.l.b16 %v413
        %v494 = vunpack.c.l.b16 %v414
        %v495 = vunpack.c.l.b16 %v415
        %v496 = vunpack.c.l.b16 %v416
        %v497 = vunpack.c.l.b16 %v417
        %v498 = vunpack.c.l.b16 %v418
        %v499 = vunpack.c.l.b16 %v419
        %v500 = vunpack.c.l.b16 %v420
        %v501 = vunpack.c.l.b16 %v421
        %v502 = vunpack.c.l.b16 %v422
        %v503 = vpack.c.b16 %v472, %v471
        %v504 = vpack.c.b16 %v474, %v473
        %v505 = vpack.c.b16 %v476, %v475
        %v506 = vpack.c.b16 %v478, %v477
        %v507 = vpack.c.b16 %v480, %v479
        %v508 = vpack.c.b16 %v482, %v481
        %v509 = vpack.c.b16 %v484, %v483
        %v510 = vpack.c.b16 %v486, %v485
        %v511 = vpack.c.b16 %v488, %v487
        %v512 = vpack.c.b16 %v490, %v489
        %v513 = vpack.c.b16 %v492, %v491
        %v514 = vpack.c.b16 %v494, %v493
        %v515 = vpack.c.b16 %v496, %v495
        %v516 = vpack.c.b16 %v498, %v497
        %v517 = vpack.c.b16 %v500, %v499
        %v518 = vpack.c.b16 %v502, %v501
        %v551 = vunpack.c.l.b16 %v423
        %v552 = vunpack.c.l.b16 %v424
        %v553 = vunpack.c.l.b16 %v425
        %v554 = vunpack.c.l.b16 %v426
        %v555 = vunpack.c.l.b16 %v427
        %v556 = vunpack.c.l.b16 %v428
        %v557 = vunpack.c.l.b16 %v429
        %v558 = vunpack.c.l.b16 %v430
        %v559 = vunpack.c.l.b16 %v431
        %v560 = vunpack.c.l.b16 %v432
        %v561 = vunpack.c.l.b16 %v433
        %v562 = vunpack.c.l.b16 %v434
        %v563 = vunpack.c.l.b16 %v435
        %v564 = vunpack.c.l.b16 %v436
        %v565 = vunpack.c.l.b16 %v437
        %v566 = vunpack.c.l.b16 %v438
        %v567 = vpack.c.b16 %v552, %v551
        %v568 = vpack.c.b16 %v554, %v553
        %v569 = vpack.c.b16 %v556, %v555
        %v570 = vpack.c.b16 %v558, %v557
        %v571 = vpack.c.b16 %v560, %v559
        %v572 = vpack.c.b16 %v562, %v561
        %v573 = vpack.c.b16 %v564, %v563
        %v574 = vpack.c.b16 %v566, %v565
        %583 = vmatpush.bf16.msra.mxu0 %v574
        %584 = vmatpush.bf16.msra.mxu0 %v573
        %585 = vmatpush.bf16.msra.mxu0 %v572
        %586 = vmatpush.bf16.msra.mxu0 %v571
        %587 = vmatpush.bf16.msra.mxu0 %v570
        %588 = vmatpush.bf16.msra.mxu0 %v569
        %589 = vmatpush.bf16.msra.mxu0 %v568
        %590 = vmatpush.bf16.msra.mxu0 %v567
        %591 = vmatmul.bf16.gmra.mxu0 %v503
        %v592 = vpop.f32.mrf.mxu0
        %v593 = vadd.f32 0.0, %v592
        %v594 = vpop.f32.mrf.mxu0
        %v595 = vadd.f32 0.0, %v594
        %596 = vmatmul.bf16.gmra.mxu0 %v504
        %v597 = vpop.f32.mrf.mxu0
        %v598 = vadd.f32 0.0, %v597
        %v599 = vpop.f32.mrf.mxu0
        %v600 = vadd.f32 0.0, %v599
        %601 = vmatmul.bf16.gmra.mxu0 %v505
        %v602 = vpop.f32.mrf.mxu0
        %v603 = vadd.f32 0.0, %v602
        %v604 = vpop.f32.mrf.mxu0
        %v605 = vadd.f32 0.0, %v604
        %606 = vmatmul.bf16.gmra.mxu0 %v506
        %v607 = vpop.f32.mrf.mxu0
        %v608 = vadd.f32 0.0, %v607
        %v609 = vpop.f32.mrf.mxu0
        %v610 = vadd.f32 0.0, %v609
        %611 = vmatmul.bf16.gmra.mxu0 %v507
        %v612 = vpop.f32.mrf.mxu0
        %v613 = vadd.f32 0.0, %v612
        %v614 = vpop.f32.mrf.mxu0
        %v615 = vadd.f32 0.0, %v614
        %616 = vmatmul.bf16.gmra.mxu0 %v508
        %v617 = vpop.f32.mrf.mxu0
        %v618 = vadd.f32 0.0, %v617
        %v619 = vpop.f32.mrf.mxu0
        %v620 = vadd.f32 0.0, %v619
        %621 = vmatmul.bf16.gmra.mxu0 %v509
        %v622 = vpop.f32.mrf.mxu0
        %v623 = vadd.f32 0.0, %v622
        %v624 = vpop.f32.mrf.mxu0
        %v625 = vadd.f32 0.0, %v624
        %626 = vmatmul.bf16.gmra.mxu0 %v510
        %v627 = vpop.f32.mrf.mxu0
        %v628 = vadd.f32 0.0, %v627
        %v629 = vpop.f32.mrf.mxu0
        %v630 = vadd.f32 0.0, %v629
        %631 = vmatmul.bf16.gmra.mxu0 %v511
        %v632 = vpop.f32.mrf.mxu0
        %v633 = vadd.f32 0.0, %v632
        %v634 = vpop.f32.mrf.mxu0
        %v635 = vadd.f32 0.0, %v634
        %636 = vmatmul.bf16.gmra.mxu0 %v512
        %v637 = vpop.f32.mrf.mxu0
        %v638 = vadd.f32 0.0, %v637
        %v639 = vpop.f32.mrf.mxu0
        %v640 = vadd.f32 0.0, %v639
        %641 = vmatmul.bf16.gmra.mxu0 %v513
        %v642 = vpop.f32.mrf.mxu0
        %v643 = vadd.f32 0.0, %v642
        %v644 = vpop.f32.mrf.mxu0
        %v645 = vadd.f32 0.0, %v644
        %646 = vmatmul.bf16.gmra.mxu0 %v514
        %v647 = vpop.f32.mrf.mxu0
        %v648 = vadd.f32 0.0, %v647
        %v649 = vpop.f32.mrf.mxu0
        %v650 = vadd.f32 0.0, %v649
        %651 = vmatmul.bf16.gmra.mxu0 %v515
        %v652 = vpop.f32.mrf.mxu0
        %v653 = vadd.f32 0.0, %v652
        %v654 = vpop.f32.mrf.mxu0
        %v655 = vadd.f32 0.0, %v654
        %656 = vmatmul.bf16.gmra.mxu0 %v516
        %v657 = vpop.f32.mrf.mxu0
        %v658 = vadd.f32 0.0, %v657
        %v659 = vpop.f32.mrf.mxu0
        %v660 = vadd.f32 0.0, %v659
        %661 = vmatmul.bf16.gmra.mxu0 %v517
        %v662 = vpop.f32.mrf.mxu0
        %v663 = vadd.f32 0.0, %v662
        %v664 = vpop.f32.mrf.mxu0
        %v665 = vadd.f32 0.0, %v664
        %666 = vmatmul.bf16.gmra.mxu0 %v518
        %v667 = vpop.f32.mrf.mxu0
        %v668 = vadd.f32 0.0, %v667
        %v669 = vpop.f32.mrf.mxu0
        %v670 = vadd.f32 0.0, %v669
        %671 = vdwg.mxu0
        %v704 = vunpack.c.l.b16 %v343
        %v705 = vunpack.c.l.b16 %v344
        %v706 = vunpack.c.l.b16 %v345
        %v707 = vunpack.c.l.b16 %v346
        %v708 = vunpack.c.l.b16 %v347
        %v709 = vunpack.c.l.b16 %v348
        %v710 = vunpack.c.l.b16 %v349
        %v711 = vunpack.c.l.b16 %v350
        %v712 = vunpack.c.l.b16 %v351
        %v713 = vunpack.c.l.b16 %v352
        %v714 = vunpack.c.l.b16 %v353
        %v715 = vunpack.c.l.b16 %v354
        %v716 = vunpack.c.l.b16 %v355
        %v717 = vunpack.c.l.b16 %v356
        %v718 = vunpack.c.l.b16 %v357
        %v719 = vunpack.c.l.b16 %v358
        %v720 = vunpack.c.l.b16 %v359
        %v721 = vunpack.c.l.b16 %v360
        %v722 = vunpack.c.l.b16 %v361
        %v723 = vunpack.c.l.b16 %v362
        %v724 = vunpack.c.l.b16 %v363
        %v725 = vunpack.c.l.b16 %v364
        %v726 = vunpack.c.l.b16 %v365
        %v727 = vunpack.c.l.b16 %v366
        %v728 = vunpack.c.l.b16 %v367
        %v729 = vunpack.c.l.b16 %v368
        %v730 = vunpack.c.l.b16 %v369
        %v731 = vunpack.c.l.b16 %v370
        %v732 = vunpack.c.l.b16 %v371
        %v733 = vunpack.c.l.b16 %v372
        %v734 = vunpack.c.l.b16 %v373
        %v735 = vunpack.c.l.b16 %v374
        %v736 = vpack.c.b16 %v705, %v704
        %v737 = vpack.c.b16 %v707, %v706
        %v738 = vpack.c.b16 %v709, %v708
        %v739 = vpack.c.b16 %v711, %v710
        %v740 = vpack.c.b16 %v713, %v712
        %v741 = vpack.c.b16 %v715, %v714
        %v742 = vpack.c.b16 %v717, %v716
        %v743 = vpack.c.b16 %v719, %v718
        %v744 = vpack.c.b16 %v721, %v720
        %v745 = vpack.c.b16 %v723, %v722
        %v746 = vpack.c.b16 %v725, %v724
        %v747 = vpack.c.b16 %v727, %v726
        %v748 = vpack.c.b16 %v729, %v728
        %v749 = vpack.c.b16 %v731, %v730
        %v750 = vpack.c.b16 %v733, %v732
        %v751 = vpack.c.b16 %v735, %v734
        %v784 = vunpack.c.l.b16 %v375
        %v785 = vunpack.c.l.b16 %v376
        %v786 = vunpack.c.l.b16 %v377
        %v787 = vunpack.c.l.b16 %v378
        %v788 = vunpack.c.l.b16 %v379
        %v789 = vunpack.c.l.b16 %v380
        %v790 = vunpack.c.l.b16 %v381
        %v791 = vunpack.c.l.b16 %v382
        %v792 = vunpack.c.l.b16 %v383
        %v793 = vunpack.c.l.b16 %v384
        %v794 = vunpack.c.l.b16 %v385
        %v795 = vunpack.c.l.b16 %v386
        %v796 = vunpack.c.l.b16 %v387
        %v797 = vunpack.c.l.b16 %v388
        %v798 = vunpack.c.l.b16 %v389
        %v799 = vunpack.c.l.b16 %v390
        %v800 = vpack.c.b16 %v785, %v784
        %v801 = vpack.c.b16 %v787, %v786
        %v802 = vpack.c.b16 %v789, %v788
        %v803 = vpack.c.b16 %v791, %v790
        %v804 = vpack.c.b16 %v793, %v792
        %v805 = vpack.c.b16 %v795, %v794
        %v806 = vpack.c.b16 %v797, %v796
        %v807 = vpack.c.b16 %v799, %v798
        %816 = vmatpush.bf16.msra.mxu0 %v807
        %817 = vmatpush.bf16.msra.mxu0 %v806
        %818 = vmatpush.bf16.msra.mxu0 %v805
        %819 = vmatpush.bf16.msra.mxu0 %v804
        %820 = vmatpush.bf16.msra.mxu0 %v803
        %821 = vmatpush.bf16.msra.mxu0 %v802
        %822 = vmatpush.bf16.msra.mxu0 %v801
        %823 = vmatpush.bf16.msra.mxu0 %v800
        %824 = vmatmul.bf16.gmra.mxu0 %v736
        %v825 = vpop.f32.mrf.mxu0
        %v826 = vadd.f32 %v593, %v825
        %v827 = vpop.f32.mrf.mxu0
        %v828 = vadd.f32 %v595, %v827
        %829 = vmatmul.bf16.gmra.mxu0 %v737
        %v830 = vpop.f32.mrf.mxu0
        %v831 = vadd.f32 %v598, %v830
        %v832 = vpop.f32.mrf.mxu0
        %v833 = vadd.f32 %v600, %v832
        %834 = vmatmul.bf16.gmra.mxu0 %v738
        %v835 = vpop.f32.mrf.mxu0
        %v836 = vadd.f32 %v603, %v835
        %v837 = vpop.f32.mrf.mxu0
        %v838 = vadd.f32 %v605, %v837
        %839 = vmatmul.bf16.gmra.mxu0 %v739
        %v840 = vpop.f32.mrf.mxu0
        %v841 = vadd.f32 %v608, %v840
        %v842 = vpop.f32.mrf.mxu0
        %v843 = vadd.f32 %v610, %v842
        %844 = vmatmul.bf16.gmra.mxu0 %v740
        %v845 = vpop.f32.mrf.mxu0
        %v846 = vadd.f32 %v613, %v845
        %v847 = vpop.f32.mrf.mxu0
        %v848 = vadd.f32 %v615, %v847
        %849 = vmatmul.bf16.gmra.mxu0 %v741
        %v850 = vpop.f32.mrf.mxu0
        %v851 = vadd.f32 %v618, %v850
        %v852 = vpop.f32.mrf.mxu0
        %v853 = vadd.f32 %v620, %v852
        %854 = vmatmul.bf16.gmra.mxu0 %v742
        %v855 = vpop.f32.mrf.mxu0
        %v856 = vadd.f32 %v623, %v855
        %v857 = vpop.f32.mrf.mxu0
        %v858 = vadd.f32 %v625, %v857
        %859 = vmatmul.bf16.gmra.mxu0 %v743
        %v860 = vpop.f32.mrf.mxu0
        %v861 = vadd.f32 %v628, %v860
        %v862 = vpop.f32.mrf.mxu0
        %v863 = vadd.f32 %v630, %v862
        %864 = vmatmul.bf16.gmra.mxu0 %v744
        %v865 = vpop.f32.mrf.mxu0
        %v866 = vadd.f32 %v633, %v865
        %v867 = vpop.f32.mrf.mxu0
        %v868 = vadd.f32 %v635, %v867
        %869 = vmatmul.bf16.gmra.mxu0 %v745
        %v870 = vpop.f32.mrf.mxu0
        %v871 = vadd.f32 %v638, %v870
        %v872 = vpop.f32.mrf.mxu0
        %v873 = vadd.f32 %v640, %v872
        %874 = vmatmul.bf16.gmra.mxu0 %v746
        %v875 = vpop.f32.mrf.mxu0
        %v876 = vadd.f32 %v643, %v875
        %v877 = vpop.f32.mrf.mxu0
        %v878 = vadd.f32 %v645, %v877
        %879 = vmatmul.bf16.gmra.mxu0 %v747
        %v880 = vpop.f32.mrf.mxu0
        %v881 = vadd.f32 %v648, %v880
        %v882 = vpop.f32.mrf.mxu0
        %v883 = vadd.f32 %v650, %v882
        %884 = vmatmul.bf16.gmra.mxu0 %v748
        %v885 = vpop.f32.mrf.mxu0
        %v886 = vadd.f32 %v653, %v885
        %v887 = vpop.f32.mrf.mxu0
        %v888 = vadd.f32 %v655, %v887
        %889 = vmatmul.bf16.gmra.mxu0 %v749
        %v890 = vpop.f32.mrf.mxu0
        %v891 = vadd.f32 %v658, %v890
        %v892 = vpop.f32.mrf.mxu0
        %v893 = vadd.f32 %v660, %v892
        %894 = vmatmul.bf16.gmra.mxu0 %v750
        %v895 = vpop.f32.mrf.mxu0
        %v896 = vadd.f32 %v663, %v895
        %v897 = vpop.f32.mrf.mxu0
        %v898 = vadd.f32 %v665, %v897
        %899 = vmatmul.bf16.gmra.mxu0 %v751
        %v900 = vpop.f32.mrf.mxu0
        %v901 = vadd.f32 %v668, %v900
        %v902 = vpop.f32.mrf.mxu0
        %v903 = vadd.f32 %v670, %v902
        %904 = vdwg.mxu0
        %v905 = vld [vmem:[%s300] sm:$0xf]
        %v906 = vld [vmem:[%s300 + $0x4] sm:$0xf]
        %v907 = vld [vmem:[%s300 + $0x8] sm:$0xf]
        %v908 = vld [vmem:[%s300 + $0xc] sm:$0xf]
        %v909 = vld [vmem:[%s300 + $0x10] sm:$0xf]
        %v910 = vld [vmem:[%s300 + $0x14] sm:$0xf]
        %v911 = vld [vmem:[%s300 + $0x18] sm:$0xf]
        %v912 = vld [vmem:[%s300 + $0x1c] sm:$0xf]
        %v913 = vld [vmem:[%s300 + $0x20] sm:$0xf]
        %v914 = vld [vmem:[%s300 + $0x24] sm:$0xf]
        %v915 = vld [vmem:[%s300 + $0x28] sm:$0xf]
        %v916 = vld [vmem:[%s300 + $0x2c] sm:$0xf]
        %v917 = vld [vmem:[%s300 + $0x30] sm:$0xf]
        %v918 = vld [vmem:[%s300 + $0x34] sm:$0xf]
        %v919 = vld [vmem:[%s300 + $0x38] sm:$0xf]
        %v920 = vld [vmem:[%s300 + $0x3c] sm:$0xf]
        %v921 = vld [vmem:[%s300 + $0x40] sm:$0xf]
        %v922 = vld [vmem:[%s300 + $0x44] sm:$0xf]
        %v923 = vld [vmem:[%s300 + $0x48] sm:$0xf]
        %v924 = vld [vmem:[%s300 + $0x4c] sm:$0xf]
        %v925 = vld [vmem:[%s300 + $0x50] sm:$0xf]
        %v926 = vld [vmem:[%s300 + $0x54] sm:$0xf]
        %v927 = vld [vmem:[%s300 + $0x58] sm:$0xf]
        %v928 = vld [vmem:[%s300 + $0x5c] sm:$0xf]
        %v929 = vld [vmem:[%s300 + $0x60] sm:$0xf]
        %v930 = vld [vmem:[%s300 + $0x64] sm:$0xf]
        %v931 = vld [vmem:[%s300 + $0x68] sm:$0xf]
        %v932 = vld [vmem:[%s300 + $0x6c] sm:$0xf]
        %v933 = vld [vmem:[%s300 + $0x70] sm:$0xf]
        %v934 = vld [vmem:[%s300 + $0x74] sm:$0xf]
        %v935 = vld [vmem:[%s300 + $0x78] sm:$0xf]
        %v936 = vld [vmem:[%s300 + $0x7c] sm:$0xf]
        %v937 = vld [vmem:[#allocation8 + $0x80] sm:$0xf]
        %v938 = vld [vmem:[#allocation8 + $0x84] sm:$0xf]
        %v939 = vld [vmem:[#allocation8 + $0x88] sm:$0xf]
        %v940 = vld [vmem:[#allocation8 + $0x8c] sm:$0xf]
        %v941 = vld [vmem:[#allocation8 + $0x90] sm:$0xf]
        %v942 = vld [vmem:[#allocation8 + $0x94] sm:$0xf]
        %v943 = vld [vmem:[#allocation8 + $0x98] sm:$0xf]
        %v944 = vld [vmem:[#allocation8 + $0x9c] sm:$0xf]
        %v945 = vld [vmem:[#allocation8 + $0xa0] sm:$0xf]
        %v946 = vld [vmem:[#allocation8 + $0xa4] sm:$0xf]
        %v947 = vld [vmem:[#allocation8 + $0xa8] sm:$0xf]
        %v948 = vld [vmem:[#allocation8 + $0xac] sm:$0xf]
        %v949 = vld [vmem:[#allocation8 + $0xb0] sm:$0xf]
        %v950 = vld [vmem:[#allocation8 + $0xb4] sm:$0xf]
        %v951 = vld [vmem:[#allocation8 + $0xb8] sm:$0xf]
        %v952 = vld [vmem:[#allocation8 + $0xbc] sm:$0xf]
        %v985 = vunpack.c.l.b16 %v905
        %v986 = vunpack.c.l.b16 %v906
        %v987 = vunpack.c.l.b16 %v907
        %v988 = vunpack.c.l.b16 %v908
        %v989 = vunpack.c.l.b16 %v909
        %v990 = vunpack.c.l.b16 %v910
        %v991 = vunpack.c.l.b16 %v911
        %v992 = vunpack.c.l.b16 %v912
        %v993 = vunpack.c.l.b16 %v913
        %v994 = vunpack.c.l.b16 %v914
        %v995 = vunpack.c.l.b16 %v915
        %v996 = vunpack.c.l.b16 %v916
        %v997 = vunpack.c.l.b16 %v917
        %v998 = vunpack.c.l.b16 %v918
        %v999 = vunpack.c.l.b16 %v919
        %v1000 = vunpack.c.l.b16 %v920
        %v1001 = vunpack.c.l.b16 %v921
        %v1002 = vunpack.c.l.b16 %v922
        %v1003 = vunpack.c.l.b16 %v923
        %v1004 = vunpack.c.l.b16 %v924
        %v1005 = vunpack.c.l.b16 %v925
        %v1006 = vunpack.c.l.b16 %v926
        %v1007 = vunpack.c.l.b16 %v927
        %v1008 = vunpack.c.l.b16 %v928
        %v1009 = vunpack.c.l.b16 %v929
        %v1010 = vunpack.c.l.b16 %v930
        %v1011 = vunpack.c.l.b16 %v931
        %v1012 = vunpack.c.l.b16 %v932
        %v1013 = vunpack.c.l.b16 %v933
        %v1014 = vunpack.c.l.b16 %v934
        %v1015 = vunpack.c.l.b16 %v935
        %v1016 = vunpack.c.l.b16 %v936
        %v1017 = vpack.c.b16 %v986, %v985
        %v1018 = vpack.c.b16 %v988, %v987
        %v1019 = vpack.c.b16 %v990, %v989
        %v1020 = vpack.c.b16 %v992, %v991
        %v1021 = vpack.c.b16 %v994, %v993
        %v1022 = vpack.c.b16 %v996, %v995
        %v1023 = vpack.c.b16 %v998, %v997
        %v1024 = vpack.c.b16 %v1000, %v999
        %v1025 = vpack.c.b16 %v1002, %v1001
        %v1026 = vpack.c.b16 %v1004, %v1003
        %v1027 = vpack.c.b16 %v1006, %v1005
        %v1028 = vpack.c.b16 %v1008, %v1007
        %v1029 = vpack.c.b16 %v1010, %v1009
        %v1030 = vpack.c.b16 %v1012, %v1011
        %v1031 = vpack.c.b16 %v1014, %v1013
        %v1032 = vpack.c.b16 %v1016, %v1015
        %v1065 = vunpack.c.l.b16 %v937
        %v1066 = vunpack.c.l.b16 %v938
        %v1067 = vunpack.c.l.b16 %v939
        %v1068 = vunpack.c.l.b16 %v940
        %v1069 = vunpack.c.l.b16 %v941
        %v1070 = vunpack.c.l.b16 %v942
        %v1071 = vunpack.c.l.b16 %v943
        %v1072 = vunpack.c.l.b16 %v944
        %v1073 = vunpack.c.l.b16 %v945
        %v1074 = vunpack.c.l.b16 %v946
        %v1075 = vunpack.c.l.b16 %v947
        %v1076 = vunpack.c.l.b16 %v948
        %v1077 = vunpack.c.l.b16 %v949
        %v1078 = vunpack.c.l.b16 %v950
        %v1079 = vunpack.c.l.b16 %v951
        %v1080 = vunpack.c.l.b16 %v952
        %v1081 = vpack.c.b16 %v1066, %v1065
        %v1082 = vpack.c.b16 %v1068, %v1067
        %v1083 = vpack.c.b16 %v1070, %v1069
        %v1084 = vpack.c.b16 %v1072, %v1071
        %v1085 = vpack.c.b16 %v1074, %v1073
        %v1086 = vpack.c.b16 %v1076, %v1075
        %v1087 = vpack.c.b16 %v1078, %v1077
        %v1088 = vpack.c.b16 %v1080, %v1079
        %1097 = vmatpush.bf16.msra.mxu0 %v1088
        %1098 = vmatpush.bf16.msra.mxu0 %v1087
        %1099 = vmatpush.bf16.msra.mxu0 %v1086
        %1100 = vmatpush.bf16.msra.mxu0 %v1085
        %1101 = vmatpush.bf16.msra.mxu0 %v1084
        %1102 = vmatpush.bf16.msra.mxu0 %v1083
        %1103 = vmatpush.bf16.msra.mxu0 %v1082
        %1104 = vmatpush.bf16.msra.mxu0 %v1081
        %1105 = vmatmul.bf16.gmra.mxu0 %v1017
        %v1106 = vpop.f32.mrf.mxu0
        %v1107 = vadd.f32 0.0, %v1106
        %v1108 = vpop.f32.mrf.mxu0
        %v1109 = vadd.f32 0.0, %v1108
        %1110 = vmatmul.bf16.gmra.mxu0 %v1018
        %v1111 = vpop.f32.mrf.mxu0
        %v1112 = vadd.f32 0.0, %v1111
        %v1113 = vpop.f32.mrf.mxu0
        %v1114 = vadd.f32 0.0, %v1113
        %1115 = vmatmul.bf16.gmra.mxu0 %v1019
        %v1116 = vpop.f32.mrf.mxu0
        %v1117 = vadd.f32 0.0, %v1116
        %v1118 = vpop.f32.mrf.mxu0
        %v1119 = vadd.f32 0.0, %v1118
        %1120 = vmatmul.bf16.gmra.mxu0 %v1020
        %v1121 = vpop.f32.mrf.mxu0
        %v1122 = vadd.f32 0.0, %v1121
        %v1123 = vpop.f32.mrf.mxu0
        %v1124 = vadd.f32 0.0, %v1123
        %1125 = vmatmul.bf16.gmra.mxu0 %v1021
        %v1126 = vpop.f32.mrf.mxu0
        %v1127 = vadd.f32 0.0, %v1126
        %v1128 = vpop.f32.mrf.mxu0
        %v1129 = vadd.f32 0.0, %v1128
        %1130 = vmatmul.bf16.gmra.mxu0 %v1022
        %v1131 = vpop.f32.mrf.mxu0
        %v1132 = vadd.f32 0.0, %v1131
        %v1133 = vpop.f32.mrf.mxu0
        %v1134 = vadd.f32 0.0, %v1133
        %1135 = vmatmul.bf16.gmra.mxu0 %v1023
        %v1136 = vpop.f32.mrf.mxu0
        %v1137 = vadd.f32 0.0, %v1136
        %v1138 = vpop.f32.mrf.mxu0
        %v1139 = vadd.f32 0.0, %v1138
        %1140 = vmatmul.bf16.gmra.mxu0 %v1024
        %v1141 = vpop.f32.mrf.mxu0
        %v1142 = vadd.f32 0.0, %v1141
        %v1143 = vpop.f32.mrf.mxu0
        %v1144 = vadd.f32 0.0, %v1143
        %1145 = vmatmul.bf16.gmra.mxu0 %v1025
        %v1146 = vpop.f32.mrf.mxu0
        %v1147 = vadd.f32 0.0, %v1146
        %v1148 = vpop.f32.mrf.mxu0
        %v1149 = vadd.f32 0.0, %v1148
        %1150 = vmatmul.bf16.gmra.mxu0 %v1026
        %v1151 = vpop.f32.mrf.mxu0
        %v1152 = vadd.f32 0.0, %v1151
        %v1153 = vpop.f32.mrf.mxu0
        %v1154 = vadd.f32 0.0, %v1153
        %1155 = vmatmul.bf16.gmra.mxu0 %v1027
        %v1156 = vpop.f32.mrf.mxu0
        %v1157 = vadd.f32 0.0, %v1156
        %v1158 = vpop.f32.mrf.mxu0
        %v1159 = vadd.f32 0.0, %v1158
        %1160 = vmatmul.bf16.gmra.mxu0 %v1028
        %v1161 = vpop.f32.mrf.mxu0
        %v1162 = vadd.f32 0.0, %v1161
        %v1163 = vpop.f32.mrf.mxu0
        %v1164 = vadd.f32 0.0, %v1163
        %1165 = vmatmul.bf16.gmra.mxu0 %v1029
        %v1166 = vpop.f32.mrf.mxu0
        %v1167 = vadd.f32 0.0, %v1166
        %v1168 = vpop.f32.mrf.mxu0
        %v1169 = vadd.f32 0.0, %v1168
        %1170 = vmatmul.bf16.gmra.mxu0 %v1030
        %v1171 = vpop.f32.mrf.mxu0
        %v1172 = vadd.f32 0.0, %v1171
        %v1173 = vpop.f32.mrf.mxu0
        %v1174 = vadd.f32 0.0, %v1173
        %1175 = vmatmul.bf16.gmra.mxu0 %v1031
        %v1176 = vpop.f32.mrf.mxu0
        %v1177 = vadd.f32 0.0, %v1176
        %v1178 = vpop.f32.mrf.mxu0
        %v1179 = vadd.f32 0.0, %v1178
        %1180 = vmatmul.bf16.gmra.mxu0 %v1032
        %v1181 = vpop.f32.mrf.mxu0
        %v1182 = vadd.f32 0.0, %v1181
        %v1183 = vpop.f32.mrf.mxu0
        %v1184 = vadd.f32 0.0, %v1183
        %1185 = vdwg.mxu0
        %v1186 = vadd.f32 %v826, %v1107
        %v1187 = vadd.f32 %v828, %v1109
        %v1188 = vadd.f32 %v831, %v1112
        %v1189 = vadd.f32 %v833, %v1114
        %v1190 = vadd.f32 %v836, %v1117
        %v1191 = vadd.f32 %v838, %v1119
        %v1192 = vadd.f32 %v841, %v1122
        %v1193 = vadd.f32 %v843, %v1124
        %v1194 = vadd.f32 %v846, %v1127
        %v1195 = vadd.f32 %v848, %v1129
        %v1196 = vadd.f32 %v851, %v1132
        %v1197 = vadd.f32 %v853, %v1134
        %v1198 = vadd.f32 %v856, %v1137
        %v1199 = vadd.f32 %v858, %v1139
        %v1200 = vadd.f32 %v861, %v1142
        %v1201 = vadd.f32 %v863, %v1144
        %v1202 = vadd.f32 %v866, %v1147
        %v1203 = vadd.f32 %v868, %v1149
        %v1204 = vadd.f32 %v871, %v1152
        %v1205 = vadd.f32 %v873, %v1154
        %v1206 = vadd.f32 %v876, %v1157
        %v1207 = vadd.f32 %v878, %v1159
        %v1208 = vadd.f32 %v881, %v1162
        %v1209 = vadd.f32 %v883, %v1164
        %v1210 = vadd.f32 %v886, %v1167
        %v1211 = vadd.f32 %v888, %v1169
        %v1212 = vadd.f32 %v891, %v1172
        %v1213 = vadd.f32 %v893, %v1174
        %v1214 = vadd.f32 %v896, %v1177
        %v1215 = vadd.f32 %v898, %v1179
        %v1216 = vadd.f32 %v901, %v1182
        %v1217 = vadd.f32 %v903, %v1184
        %v1218 = vld [vmem:[%s280 + $0x8] sm:$0xf]
        %v1219 = vld [vmem:[%s280 + $0xc] sm:$0xf]
        %v1220 = vld [vmem:[%s280 + $0x10] sm:$0xf]
        %v1221 = vld [vmem:[%s280 + $0x14] sm:$0xf]
        %v1222 = vld [vmem:[%s280 + $0x18] sm:$0xf]
        %v1223 = vld [vmem:[%s280 + $0x1c] sm:$0xf]
        %v1224 = vld [vmem:[%s280 + $0x20] sm:$0xf]
        %v1225 = vld [vmem:[%s280 + $0x24] sm:$0xf]
        %v1226 = vld [vmem:[%s280 + $0x28] sm:$0xf]
        %v1227 = vld [vmem:[%s280 + $0x2c] sm:$0xf]
        %v1228 = vld [vmem:[%s280 + $0x30] sm:$0xf]
        %v1229 = vld [vmem:[%s280 + $0x34] sm:$0xf]
        %v1230 = vld [vmem:[%s280 + $0x38] sm:$0xf]
        %v1231 = vld [vmem:[%s280 + $0x3c] sm:$0xf]
        %v1232 = vld [vmem:[%s280 + $0x40] sm:$0xf]
        %v1233 = vld [vmem:[%s280 + $0x44] sm:$0xf]
        %v1234 = vld [vmem:[%s280 + $0x48] sm:$0xf]
        %v1235 = vld [vmem:[%s280 + $0x4c] sm:$0xf]
        %v1236 = vld [vmem:[%s280 + $0x50] sm:$0xf]
        %v1237 = vld [vmem:[%s280 + $0x54] sm:$0xf]
        %v1238 = vld [vmem:[%s280 + $0x58] sm:$0xf]
        %v1239 = vld [vmem:[%s280 + $0x5c] sm:$0xf]
        %v1240 = vld [vmem:[%s280 + $0x60] sm:$0xf]
        %v1241 = vld [vmem:[%s280 + $0x64] sm:$0xf]
        %v1242 = vld [vmem:[%s280 + $0x68] sm:$0xf]
        %v1243 = vld [vmem:[%s280 + $0x6c] sm:$0xf]
        %v1244 = vld [vmem:[%s280 + $0x70] sm:$0xf]
        %v1245 = vld [vmem:[%s280 + $0x74] sm:$0xf]
        %v1246 = vld [vmem:[%s280 + $0x78] sm:$0xf]
        %v1247 = vld [vmem:[%s280 + $0x7c] sm:$0xf]
        %v1248 = vld [vmem:[%s280 + $0x80] sm:$0xf]
        %v1249 = vld [vmem:[%s280 + $0x84] sm:$0xf]
        %v1250 = vld [vmem:[#allocation8 + $0xc0] sm:$0xf]
        %v1251 = vld [vmem:[#allocation8 + $0xc4] sm:$0xf]
        %v1252 = vld [vmem:[#allocation8 + $0xc8] sm:$0xf]
        %v1253 = vld [vmem:[#allocation8 + $0xcc] sm:$0xf]
        %v1254 = vld [vmem:[#allocation8 + $0xd0] sm:$0xf]
        %v1255 = vld [vmem:[#allocation8 + $0xd4] sm:$0xf]
        %v1256 = vld [vmem:[#allocation8 + $0xd8] sm:$0xf]
        %v1257 = vld [vmem:[#allocation8 + $0xdc] sm:$0xf]
        %v1258 = vld [vmem:[#allocation8 + $0xe0] sm:$0xf]
        %v1259 = vld [vmem:[#allocation8 + $0xe4] sm:$0xf]
        %v1260 = vld [vmem:[#allocation8 + $0xe8] sm:$0xf]
        %v1261 = vld [vmem:[#allocation8 + $0xec] sm:$0xf]
        %v1262 = vld [vmem:[#allocation8 + $0xf0] sm:$0xf]
        %v1263 = vld [vmem:[#allocation8 + $0xf4] sm:$0xf]
        %v1264 = vld [vmem:[#allocation8 + $0xf8] sm:$0xf]
        %v1265 = vld [vmem:[#allocation8 + $0xfc] sm:$0xf]
        %v1298 = vunpack.c.l.b16 %v1218
        %v1299 = vunpack.c.l.b16 %v1219
        %v1300 = vunpack.c.l.b16 %v1220
        %v1301 = vunpack.c.l.b16 %v1221
        %v1302 = vunpack.c.l.b16 %v1222
        %v1303 = vunpack.c.l.b16 %v1223
        %v1304 = vunpack.c.l.b16 %v1224
        %v1305 = vunpack.c.l.b16 %v1225
        %v1306 = vunpack.c.l.b16 %v1226
        %v1307 = vunpack.c.l.b16 %v1227
        %v1308 = vunpack.c.l.b16 %v1228
        %v1309 = vunpack.c.l.b16 %v1229
        %v1310 = vunpack.c.l.b16 %v1230
        %v1311 = vunpack.c.l.b16 %v1231
        %v1312 = vunpack.c.l.b16 %v1232
        %v1313 = vunpack.c.l.b16 %v1233
        %v1314 = vunpack.c.l.b16 %v1234
        %v1315 = vunpack.c.l.b16 %v1235
        %v1316 = vunpack.c.l.b16 %v1236
        %v1317 = vunpack.c.l.b16 %v1237
        %v1318 = vunpack.c.l.b16 %v1238
        %v1319 = vunpack.c.l.b16 %v1239
        %v1320 = vunpack.c.l.b16 %v1240
        %v1321 = vunpack.c.l.b16 %v1241
        %v1322 = vunpack.c.l.b16 %v1242
        %v1323 = vunpack.c.l.b16 %v1243
        %v1324 = vunpack.c.l.b16 %v1244
        %v1325 = vunpack.c.l.b16 %v1245
        %v1326 = vunpack.c.l.b16 %v1246
        %v1327 = vunpack.c.l.b16 %v1247
        %v1328 = vunpack.c.l.b16 %v1248
        %v1329 = vunpack.c.l.b16 %v1249
        %v1330 = vpack.c.b16 %v1299, %v1298
        %v1331 = vpack.c.b16 %v1301, %v1300
        %v1332 = vpack.c.b16 %v1303, %v1302
        %v1333 = vpack.c.b16 %v1305, %v1304
        %v1334 = vpack.c.b16 %v1307, %v1306
        %v1335 = vpack.c.b16 %v1309, %v1308
        %v1336 = vpack.c.b16 %v1311, %v1310
        %v1337 = vpack.c.b16 %v1313, %v1312
        %v1338 = vpack.c.b16 %v1315, %v1314
        %v1339 = vpack.c.b16 %v1317, %v1316
        %v1340 = vpack.c.b16 %v1319, %v1318
        %v1341 = vpack.c.b16 %v1321, %v1320
        %v1342 = vpack.c.b16 %v1323, %v1322
        %v1343 = vpack.c.b16 %v1325, %v1324
        %v1344 = vpack.c.b16 %v1327, %v1326
        %v1345 = vpack.c.b16 %v1329, %v1328
        %v1378 = vunpack.c.l.b16 %v1250
        %v1379 = vunpack.c.l.b16 %v1251
        %v1380 = vunpack.c.l.b16 %v1252
        %v1381 = vunpack.c.l.b16 %v1253
        %v1382 = vunpack.c.l.b16 %v1254
        %v1383 = vunpack.c.l.b16 %v1255
        %v1384 = vunpack.c.l.b16 %v1256
        %v1385 = vunpack.c.l.b16 %v1257
        %v1386 = vunpack.c.l.b16 %v1258
        %v1387 = vunpack.c.l.b16 %v1259
        %v1388 = vunpack.c.l.b16 %v1260
        %v1389 = vunpack.c.l.b16 %v1261
        %v1390 = vunpack.c.l.b16 %v1262
        %v1391 = vunpack.c.l.b16 %v1263
        %v1392 = vunpack.c.l.b16 %v1264
        %v1393 = vunpack.c.l.b16 %v1265
        %v1394 = vpack.c.b16 %v1379, %v1378
        %v1395 = vpack.c.b16 %v1381, %v1380
        %v1396 = vpack.c.b16 %v1383, %v1382
        %v1397 = vpack.c.b16 %v1385, %v1384
        %v1398 = vpack.c.b16 %v1387, %v1386
        %v1399 = vpack.c.b16 %v1389, %v1388
        %v1400 = vpack.c.b16 %v1391, %v1390
        %v1401 = vpack.c.b16 %v1393, %v1392
        %1410 = vmatpush.bf16.msra.mxu0 %v1401
        %1411 = vmatpush.bf16.msra.mxu0 %v1400
        %1412 = vmatpush.bf16.msra.mxu0 %v1399
        %1413 = vmatpush.bf16.msra.mxu0 %v1398
        %1414 = vmatpush.bf16.msra.mxu0 %v1397
        %1415 = vmatpush.bf16.msra.mxu0 %v1396
        %1416 = vmatpush.bf16.msra.mxu0 %v1395
        %1417 = vmatpush.bf16.msra.mxu0 %v1394
        %1418 = vmatmul.bf16.gmra.mxu0 %v1330
        %v1419 = vpop.f32.mrf.mxu0
        %v1420 = vadd.f32 0.0, %v1419
        %v1421 = vpop.f32.mrf.mxu0
        %v1422 = vadd.f32 0.0, %v1421
        %1423 = vmatmul.bf16.gmra.mxu0 %v1331
        %v1424 = vpop.f32.mrf.mxu0
        %v1425 = vadd.f32 0.0, %v1424
        %v1426 = vpop.f32.mrf.mxu0
        %v1427 = vadd.f32 0.0, %v1426
        %1428 = vmatmul.bf16.gmra.mxu0 %v1332
        %v1429 = vpop.f32.mrf.mxu0
        %v1430 = vadd.f32 0.0, %v1429
        %v1431 = vpop.f32.mrf.mxu0
        %v1432 = vadd.f32 0.0, %v1431
        %1433 = vmatmul.bf16.gmra.mxu0 %v1333
        %v1434 = vpop.f32.mrf.mxu0
        %v1435 = vadd.f32 0.0, %v1434
        %v1436 = vpop.f32.mrf.mxu0
        %v1437 = vadd.f32 0.0, %v1436
        %1438 = vmatmul.bf16.gmra.mxu0 %v1334
        %v1439 = vpop.f32.mrf.mxu0
        %v1440 = vadd.f32 0.0, %v1439
        %v1441 = vpop.f32.mrf.mxu0
        %v1442 = vadd.f32 0.0, %v1441
        %1443 = vmatmul.bf16.gmra.mxu0 %v1335
        %v1444 = vpop.f32.mrf.mxu0
        %v1445 = vadd.f32 0.0, %v1444
        %v1446 = vpop.f32.mrf.mxu0
        %v1447 = vadd.f32 0.0, %v1446
        %1448 = vmatmul.bf16.gmra.mxu0 %v1336
        %v1449 = vpop.f32.mrf.mxu0
        %v1450 = vadd.f32 0.0, %v1449
        %v1451 = vpop.f32.mrf.mxu0
        %v1452 = vadd.f32 0.0, %v1451
        %1453 = vmatmul.bf16.gmra.mxu0 %v1337
        %v1454 = vpop.f32.mrf.mxu0
        %v1455 = vadd.f32 0.0, %v1454
        %v1456 = vpop.f32.mrf.mxu0
        %v1457 = vadd.f32 0.0, %v1456
        %1458 = vmatmul.bf16.gmra.mxu0 %v1338
        %v1459 = vpop.f32.mrf.mxu0
        %v1460 = vadd.f32 0.0, %v1459
        %v1461 = vpop.f32.mrf.mxu0
        %v1462 = vadd.f32 0.0, %v1461
        %1463 = vmatmul.bf16.gmra.mxu0 %v1339
        %v1464 = vpop.f32.mrf.mxu0
        %v1465 = vadd.f32 0.0, %v1464
        %v1466 = vpop.f32.mrf.mxu0
        %v1467 = vadd.f32 0.0, %v1466
        %1468 = vmatmul.bf16.gmra.mxu0 %v1340
        %v1469 = vpop.f32.mrf.mxu0
        %v1470 = vadd.f32 0.0, %v1469
        %v1471 = vpop.f32.mrf.mxu0
        %v1472 = vadd.f32 0.0, %v1471
        %1473 = vmatmul.bf16.gmra.mxu0 %v1341
        %v1474 = vpop.f32.mrf.mxu0
        %v1475 = vadd.f32 0.0, %v1474
        %v1476 = vpop.f32.mrf.mxu0
        %v1477 = vadd.f32 0.0, %v1476
        %1478 = vmatmul.bf16.gmra.mxu0 %v1342
        %v1479 = vpop.f32.mrf.mxu0
        %v1480 = vadd.f32 0.0, %v1479
        %v1481 = vpop.f32.mrf.mxu0
        %v1482 = vadd.f32 0.0, %v1481
        %1483 = vmatmul.bf16.gmra.mxu0 %v1343
        %v1484 = vpop.f32.mrf.mxu0
        %v1485 = vadd.f32 0.0, %v1484
        %v1486 = vpop.f32.mrf.mxu0
        %v1487 = vadd.f32 0.0, %v1486
        %1488 = vmatmul.bf16.gmra.mxu0 %v1344
        %v1489 = vpop.f32.mrf.mxu0
        %v1490 = vadd.f32 0.0, %v1489
        %v1491 = vpop.f32.mrf.mxu0
        %v1492 = vadd.f32 0.0, %v1491
        %1493 = vmatmul.bf16.gmra.mxu0 %v1345
        %v1494 = vpop.f32.mrf.mxu0
        %v1495 = vadd.f32 0.0, %v1494
        %v1496 = vpop.f32.mrf.mxu0
        %v1497 = vadd.f32 0.0, %v1496
        %1498 = vdwg.mxu0
        %v1499 = vadd.f32 %v1186, %v1420
        %v1500 = vadd.f32 %v1187, %v1422
        %v1501 = vadd.f32 %v1188, %v1425
        %v1502 = vadd.f32 %v1189, %v1427
        %v1503 = vadd.f32 %v1190, %v1430
        %v1504 = vadd.f32 %v1191, %v1432
        %v1505 = vadd.f32 %v1192, %v1435
        %v1506 = vadd.f32 %v1193, %v1437
        %v1507 = vadd.f32 %v1194, %v1440
        %v1508 = vadd.f32 %v1195, %v1442
        %v1509 = vadd.f32 %v1196, %v1445
        %v1510 = vadd.f32 %v1197, %v1447
        %v1511 = vadd.f32 %v1198, %v1450
        %v1512 = vadd.f32 %v1199, %v1452
        %v1513 = vadd.f32 %v1200, %v1455
        %v1514 = vadd.f32 %v1201, %v1457
        %v1515 = vadd.f32 %v1202, %v1460
        %v1516 = vadd.f32 %v1203, %v1462
        %v1517 = vadd.f32 %v1204, %v1465
        %v1518 = vadd.f32 %v1205, %v1467
        %v1519 = vadd.f32 %v1206, %v1470
        %v1520 = vadd.f32 %v1207, %v1472
        %v1521 = vadd.f32 %v1208, %v1475
        %v1522 = vadd.f32 %v1209, %v1477
        %v1523 = vadd.f32 %v1210, %v1480
        %v1524 = vadd.f32 %v1211, %v1482
        %v1525 = vadd.f32 %v1212, %v1485
        %v1526 = vadd.f32 %v1213, %v1487
        %v1527 = vadd.f32 %v1214, %v1490
        %v1528 = vadd.f32 %v1215, %v1492
        %v1529 = vadd.f32 %v1216, %v1495
        %v1530 = vadd.f32 %v1217, %v1497
        %v1531 = vld [vmem:[%s290 + $0x8] sm:$0xf]
        %v1532 = vld [vmem:[%s290 + $0xc] sm:$0xf]
        %v1533 = vld [vmem:[%s290 + $0x10] sm:$0xf]
        %v1534 = vld [vmem:[%s290 + $0x14] sm:$0xf]
        %v1535 = vld [vmem:[%s290 + $0x18] sm:$0xf]
        %v1536 = vld [vmem:[%s290 + $0x1c] sm:$0xf]
        %v1537 = vld [vmem:[%s290 + $0x20] sm:$0xf]
        %v1538 = vld [vmem:[%s290 + $0x24] sm:$0xf]
        %v1539 = vld [vmem:[%s290 + $0x28] sm:$0xf]
        %v1540 = vld [vmem:[%s290 + $0x2c] sm:$0xf]
        %v1541 = vld [vmem:[%s290 + $0x30] sm:$0xf]
        %v1542 = vld [vmem:[%s290 + $0x34] sm:$0xf]
        %v1543 = vld [vmem:[%s290 + $0x38] sm:$0xf]
        %v1544 = vld [vmem:[%s290 + $0x3c] sm:$0xf]
        %v1545 = vld [vmem:[%s290 + $0x40] sm:$0xf]
        %v1546 = vld [vmem:[%s290 + $0x44] sm:$0xf]
        %v1547 = vld [vmem:[%s290 + $0x48] sm:$0xf]
        %v1548 = vld [vmem:[%s290 + $0x4c] sm:$0xf]
        %v1549 = vld [vmem:[%s290 + $0x50] sm:$0xf]
        %v1550 = vld [vmem:[%s290 + $0x54] sm:$0xf]
        %v1551 = vld [vmem:[%s290 + $0x58] sm:$0xf]
        %v1552 = vld [vmem:[%s290 + $0x5c] sm:$0xf]
        %v1553 = vld [vmem:[%s290 + $0x60] sm:$0xf]
        %v1554 = vld [vmem:[%s290 + $0x64] sm:$0xf]
        %v1555 = vld [vmem:[%s290 + $0x68] sm:$0xf]
        %v1556 = vld [vmem:[%s290 + $0x6c] sm:$0xf]
        %v1557 = vld [vmem:[%s290 + $0x70] sm:$0xf]
        %v1558 = vld [vmem:[%s290 + $0x74] sm:$0xf]
        %v1559 = vld [vmem:[%s290 + $0x78] sm:$0xf]
        %v1560 = vld [vmem:[%s290 + $0x7c] sm:$0xf]
        %v1561 = vld [vmem:[%s290 + $0x80] sm:$0xf]
        %v1562 = vld [vmem:[%s290 + $0x84] sm:$0xf]
        %v1563 = vld [vmem:[#allocation8 + $0x100] sm:$0xf]
        %v1564 = vld [vmem:[#allocation8 + $0x104] sm:$0xf]
        %v1565 = vld [vmem:[#allocation8 + $0x108] sm:$0xf]
        %v1566 = vld [vmem:[#allocation8 + $0x10c] sm:$0xf]
        %v1567 = vld [vmem:[#allocation8 + $0x110] sm:$0xf]
        %v1568 = vld [vmem:[#allocation8 + $0x114] sm:$0xf]
        %v1569 = vld [vmem:[#allocation8 + $0x118] sm:$0xf]
        %v1570 = vld [vmem:[#allocation8 + $0x11c] sm:$0xf]
        %v1571 = vld [vmem:[#allocation8 + $0x120] sm:$0xf]
        %v1572 = vld [vmem:[#allocation8 + $0x124] sm:$0xf]
        %v1573 = vld [vmem:[#allocation8 + $0x128] sm:$0xf]
        %v1574 = vld [vmem:[#allocation8 + $0x12c] sm:$0xf]
        %v1575 = vld [vmem:[#allocation8 + $0x130] sm:$0xf]
        %v1576 = vld [vmem:[#allocation8 + $0x134] sm:$0xf]
        %v1577 = vld [vmem:[#allocation8 + $0x138] sm:$0xf]
        %v1578 = vld [vmem:[#allocation8 + $0x13c] sm:$0xf]
        %v1611 = vunpack.c.l.b16 %v1531
        %v1612 = vunpack.c.l.b16 %v1532
        %v1613 = vunpack.c.l.b16 %v1533
        %v1614 = vunpack.c.l.b16 %v1534
        %v1615 = vunpack.c.l.b16 %v1535
        %v1616 = vunpack.c.l.b16 %v1536
        %v1617 = vunpack.c.l.b16 %v1537
        %v1618 = vunpack.c.l.b16 %v1538
        %v1619 = vunpack.c.l.b16 %v1539
        %v1620 = vunpack.c.l.b16 %v1540
        %v1621 = vunpack.c.l.b16 %v1541
        %v1622 = vunpack.c.l.b16 %v1542
        %v1623 = vunpack.c.l.b16 %v1543
        %v1624 = vunpack.c.l.b16 %v1544
        %v1625 = vunpack.c.l.b16 %v1545
        %v1626 = vunpack.c.l.b16 %v1546
        %v1627 = vunpack.c.l.b16 %v1547
        %v1628 = vunpack.c.l.b16 %v1548
        %v1629 = vunpack.c.l.b16 %v1549
        %v1630 = vunpack.c.l.b16 %v1550
        %v1631 = vunpack.c.l.b16 %v1551
        %v1632 = vunpack.c.l.b16 %v1552
        %v1633 = vunpack.c.l.b16 %v1553
        %v1634 = vunpack.c.l.b16 %v1554
        %v1635 = vunpack.c.l.b16 %v1555
        %v1636 = vunpack.c.l.b16 %v1556
        %v1637 = vunpack.c.l.b16 %v1557
        %v1638 = vunpack.c.l.b16 %v1558
        %v1639 = vunpack.c.l.b16 %v1559
        %v1640 = vunpack.c.l.b16 %v1560
        %v1641 = vunpack.c.l.b16 %v1561
        %v1642 = vunpack.c.l.b16 %v1562
        %v1643 = vpack.c.b16 %v1612, %v1611
        %v1644 = vpack.c.b16 %v1614, %v1613
        %v1645 = vpack.c.b16 %v1616, %v1615
        %v1646 = vpack.c.b16 %v1618, %v1617
        %v1647 = vpack.c.b16 %v1620, %v1619
        %v1648 = vpack.c.b16 %v1622, %v1621
        %v1649 = vpack.c.b16 %v1624, %v1623
        %v1650 = vpack.c.b16 %v1626, %v1625
        %v1651 = vpack.c.b16 %v1628, %v1627
        %v1652 = vpack.c.b16 %v1630, %v1629
        %v1653 = vpack.c.b16 %v1632, %v1631
        %v1654 = vpack.c.b16 %v1634, %v1633
        %v1655 = vpack.c.b16 %v1636, %v1635
        %v1656 = vpack.c.b16 %v1638, %v1637
        %v1657 = vpack.c.b16 %v1640, %v1639
        %v1658 = vpack.c.b16 %v1642, %v1641
        %v1691 = vunpack.c.l.b16 %v1563
        %v1692 = vunpack.c.l.b16 %v1564
        %v1693 = vunpack.c.l.b16 %v1565
        %v1694 = vunpack.c.l.b16 %v1566
        %v1695 = vunpack.c.l.b16 %v1567
        %v1696 = vunpack.c.l.b16 %v1568
        %v1697 = vunpack.c.l.b16 %v1569
        %v1698 = vunpack.c.l.b16 %v1570
        %v1699 = vunpack.c.l.b16 %v1571
        %v1700 = vunpack.c.l.b16 %v1572
        %v1701 = vunpack.c.l.b16 %v1573
        %v1702 = vunpack.c.l.b16 %v1574
        %v1703 = vunpack.c.l.b16 %v1575
        %v1704 = vunpack.c.l.b16 %v1576
        %v1705 = vunpack.c.l.b16 %v1577
        %v1706 = vunpack.c.l.b16 %v1578
        %v1707 = vpack.c.b16 %v1692, %v1691
        %v1708 = vpack.c.b16 %v1694, %v1693
        %v1709 = vpack.c.b16 %v1696, %v1695
        %v1710 = vpack.c.b16 %v1698, %v1697
        %v1711 = vpack.c.b16 %v1700, %v1699
        %v1712 = vpack.c.b16 %v1702, %v1701
        %v1713 = vpack.c.b16 %v1704, %v1703
        %v1714 = vpack.c.b16 %v1706, %v1705
        %1723 = vmatpush.bf16.msra.mxu0 %v1714
        %1724 = vmatpush.bf16.msra.mxu0 %v1713
        %1725 = vmatpush.bf16.msra.mxu0 %v1712
        %1726 = vmatpush.bf16.msra.mxu0 %v1711
        %1727 = vmatpush.bf16.msra.mxu0 %v1710
        %1728 = vmatpush.bf16.msra.mxu0 %v1709
        %1729 = vmatpush.bf16.msra.mxu0 %v1708
        %1730 = vmatpush.bf16.msra.mxu0 %v1707
        %1731 = vmatmul.bf16.gmra.mxu0 %v1643
        %v1732 = vpop.f32.mrf.mxu0
        %v1733 = vadd.f32 0.0, %v1732
        %v1734 = vpop.f32.mrf.mxu0
        %v1735 = vadd.f32 0.0, %v1734
        %1736 = vmatmul.bf16.gmra.mxu0 %v1644
        %v1737 = vpop.f32.mrf.mxu0
        %v1738 = vadd.f32 0.0, %v1737
        %v1739 = vpop.f32.mrf.mxu0
        %v1740 = vadd.f32 0.0, %v1739
        %1741 = vmatmul.bf16.gmra.mxu0 %v1645
        %v1742 = vpop.f32.mrf.mxu0
        %v1743 = vadd.f32 0.0, %v1742
        %v1744 = vpop.f32.mrf.mxu0
        %v1745 = vadd.f32 0.0, %v1744
        %1746 = vmatmul.bf16.gmra.mxu0 %v1646
        %v1747 = vpop.f32.mrf.mxu0
        %v1748 = vadd.f32 0.0, %v1747
        %v1749 = vpop.f32.mrf.mxu0
        %v1750 = vadd.f32 0.0, %v1749
        %1751 = vmatmul.bf16.gmra.mxu0 %v1647
        %v1752 = vpop.f32.mrf.mxu0
        %v1753 = vadd.f32 0.0, %v1752
        %v1754 = vpop.f32.mrf.mxu0
        %v1755 = vadd.f32 0.0, %v1754
        %1756 = vmatmul.bf16.gmra.mxu0 %v1648
        %v1757 = vpop.f32.mrf.mxu0
        %v1758 = vadd.f32 0.0, %v1757
        %v1759 = vpop.f32.mrf.mxu0
        %v1760 = vadd.f32 0.0, %v1759
        %1761 = vmatmul.bf16.gmra.mxu0 %v1649
        %v1762 = vpop.f32.mrf.mxu0
        %v1763 = vadd.f32 0.0, %v1762
        %v1764 = vpop.f32.mrf.mxu0
        %v1765 = vadd.f32 0.0, %v1764
        %1766 = vmatmul.bf16.gmra.mxu0 %v1650
        %v1767 = vpop.f32.mrf.mxu0
        %v1768 = vadd.f32 0.0, %v1767
        %v1769 = vpop.f32.mrf.mxu0
        %v1770 = vadd.f32 0.0, %v1769
        %1771 = vmatmul.bf16.gmra.mxu0 %v1651
        %v1772 = vpop.f32.mrf.mxu0
        %v1773 = vadd.f32 0.0, %v1772
        %v1774 = vpop.f32.mrf.mxu0
        %v1775 = vadd.f32 0.0, %v1774
        %1776 = vmatmul.bf16.gmra.mxu0 %v1652
        %v1777 = vpop.f32.mrf.mxu0
        %v1778 = vadd.f32 0.0, %v1777
        %v1779 = vpop.f32.mrf.mxu0
        %v1780 = vadd.f32 0.0, %v1779
        %1781 = vmatmul.bf16.gmra.mxu0 %v1653
        %v1782 = vpop.f32.mrf.mxu0
        %v1783 = vadd.f32 0.0, %v1782
        %v1784 = vpop.f32.mrf.mxu0
        %v1785 = vadd.f32 0.0, %v1784
        %1786 = vmatmul.bf16.gmra.mxu0 %v1654
        %v1787 = vpop.f32.mrf.mxu0
        %v1788 = vadd.f32 0.0, %v1787
        %v1789 = vpop.f32.mrf.mxu0
        %v1790 = vadd.f32 0.0, %v1789
        %1791 = vmatmul.bf16.gmra.mxu0 %v1655
        %v1792 = vpop.f32.mrf.mxu0
        %v1793 = vadd.f32 0.0, %v1792
        %v1794 = vpop.f32.mrf.mxu0
        %v1795 = vadd.f32 0.0, %v1794
        %1796 = vmatmul.bf16.gmra.mxu0 %v1656
        %v1797 = vpop.f32.mrf.mxu0
        %v1798 = vadd.f32 0.0, %v1797
        %v1799 = vpop.f32.mrf.mxu0
        %v1800 = vadd.f32 0.0, %v1799
        %1801 = vmatmul.bf16.gmra.mxu0 %v1657
        %v1802 = vpop.f32.mrf.mxu0
        %v1803 = vadd.f32 0.0, %v1802
        %v1804 = vpop.f32.mrf.mxu0
        %v1805 = vadd.f32 0.0, %v1804
        %1806 = vmatmul.bf16.gmra.mxu0 %v1658
        %v1807 = vpop.f32.mrf.mxu0
        %v1808 = vadd.f32 0.0, %v1807
        %v1809 = vpop.f32.mrf.mxu0
        %v1810 = vadd.f32 0.0, %v1809
        %1811 = vdwg.mxu0
        %v1812 = vadd.f32 %v1499, %v1733
        %v1813 = vadd.f32 %v1500, %v1735
        %v1814 = vadd.f32 %v1501, %v1738
        %v1815 = vadd.f32 %v1502, %v1740
        %v1816 = vadd.f32 %v1503, %v1743
        %v1817 = vadd.f32 %v1504, %v1745
        %v1818 = vadd.f32 %v1505, %v1748
        %v1819 = vadd.f32 %v1506, %v1750
        %v1820 = vadd.f32 %v1507, %v1753
        %v1821 = vadd.f32 %v1508, %v1755
        %v1822 = vadd.f32 %v1509, %v1758
        %v1823 = vadd.f32 %v1510, %v1760
        %v1824 = vadd.f32 %v1511, %v1763
        %v1825 = vadd.f32 %v1512, %v1765
        %v1826 = vadd.f32 %v1513, %v1768
        %v1827 = vadd.f32 %v1514, %v1770
        %v1828 = vadd.f32 %v1515, %v1773
        %v1829 = vadd.f32 %v1516, %v1775
        %v1830 = vadd.f32 %v1517, %v1778
        %v1831 = vadd.f32 %v1518, %v1780
        %v1832 = vadd.f32 %v1519, %v1783
        %v1833 = vadd.f32 %v1520, %v1785
        %v1834 = vadd.f32 %v1521, %v1788
        %v1835 = vadd.f32 %v1522, %v1790
        %v1836 = vadd.f32 %v1523, %v1793
        %v1837 = vadd.f32 %v1524, %v1795
        %v1838 = vadd.f32 %v1525, %v1798
        %v1839 = vadd.f32 %v1526, %v1800
        %v1840 = vadd.f32 %v1527, %v1803
        %v1841 = vadd.f32 %v1528, %v1805
        %v1842 = vadd.f32 %v1529, %v1808
        %v1843 = vadd.f32 %v1530, %v1810
        %v1844 = vld [vmem:[%s300 + $0x8] sm:$0xf]
        %v1845 = vld [vmem:[%s300 + $0xc] sm:$0xf]
        %v1846 = vld [vmem:[%s300 + $0x10] sm:$0xf]
        %v1847 = vld [vmem:[%s300 + $0x14] sm:$0xf]
        %v1848 = vld [vmem:[%s300 + $0x18] sm:$0xf]
        %v1849 = vld [vmem:[%s300 + $0x1c] sm:$0xf]
        %v1850 = vld [vmem:[%s300 + $0x20] sm:$0xf]
        %v1851 = vld [vmem:[%s300 + $0x24] sm:$0xf]
        %v1852 = vld [vmem:[%s300 + $0x28] sm:$0xf]
        %v1853 = vld [vmem:[%s300 + $0x2c] sm:$0xf]
        %v1854 = vld [vmem:[%s300 + $0x30] sm:$0xf]
        %v1855 = vld [vmem:[%s300 + $0x34] sm:$0xf]
        %v1856 = vld [vmem:[%s300 + $0x38] sm:$0xf]
        %v1857 = vld [vmem:[%s300 + $0x3c] sm:$0xf]
        %v1858 = vld [vmem:[%s300 + $0x40] sm:$0xf]
        %v1859 = vld [vmem:[%s300 + $0x44] sm:$0xf]
        %v1860 = vld [vmem:[%s300 + $0x48] sm:$0xf]
        %v1861 = vld [vmem:[%s300 + $0x4c] sm:$0xf]
        %v1862 = vld [vmem:[%s300 + $0x50] sm:$0xf]
        %v1863 = vld [vmem:[%s300 + $0x54] sm:$0xf]
        %v1864 = vld [vmem:[%s300 + $0x58] sm:$0xf]
        %v1865 = vld [vmem:[%s300 + $0x5c] sm:$0xf]
        %v1866 = vld [vmem:[%s300 + $0x60] sm:$0xf]
        %v1867 = vld [vmem:[%s300 + $0x64] sm:$0xf]
        %v1868 = vld [vmem:[%s300 + $0x68] sm:$0xf]
        %v1869 = vld [vmem:[%s300 + $0x6c] sm:$0xf]
        %v1870 = vld [vmem:[%s300 + $0x70] sm:$0xf]
        %v1871 = vld [vmem:[%s300 + $0x74] sm:$0xf]
        %v1872 = vld [vmem:[%s300 + $0x78] sm:$0xf]
        %v1873 = vld [vmem:[%s300 + $0x7c] sm:$0xf]
        %v1874 = vld [vmem:[%s300 + $0x80] sm:$0xf]
        %v1875 = vld [vmem:[%s300 + $0x84] sm:$0xf]
        %v1876 = vld [vmem:[#allocation8 + $0x140] sm:$0xf]
        %v1877 = vld [vmem:[#allocation8 + $0x144] sm:$0xf]
        %v1878 = vld [vmem:[#allocation8 + $0x148] sm:$0xf]
        %v1879 = vld [vmem:[#allocation8 + $0x14c] sm:$0xf]
        %v1880 = vld [vmem:[#allocation8 + $0x150] sm:$0xf]
        %v1881 = vld [vmem:[#allocation8 + $0x154] sm:$0xf]
        %v1882 = vld [vmem:[#allocation8 + $0x158] sm:$0xf]
        %v1883 = vld [vmem:[#allocation8 + $0x15c] sm:$0xf]
        %v1884 = vld [vmem:[#allocation8 + $0x160] sm:$0xf]
        %v1885 = vld [vmem:[#allocation8 + $0x164] sm:$0xf]
        %v1886 = vld [vmem:[#allocation8 + $0x168] sm:$0xf]
        %v1887 = vld [vmem:[#allocation8 + $0x16c] sm:$0xf]
        %v1888 = vld [vmem:[#allocation8 + $0x170] sm:$0xf]
        %v1889 = vld [vmem:[#allocation8 + $0x174] sm:$0xf]
        %v1890 = vld [vmem:[#allocation8 + $0x178] sm:$0xf]
        %v1891 = vld [vmem:[#allocation8 + $0x17c] sm:$0xf]
        %v1924 = vunpack.c.l.b16 %v1844
        %v1925 = vunpack.c.l.b16 %v1845
        %v1926 = vunpack.c.l.b16 %v1846
        %v1927 = vunpack.c.l.b16 %v1847
        %v1928 = vunpack.c.l.b16 %v1848
        %v1929 = vunpack.c.l.b16 %v1849
        %v1930 = vunpack.c.l.b16 %v1850
        %v1931 = vunpack.c.l.b16 %v1851
        %v1932 = vunpack.c.l.b16 %v1852
        %v1933 = vunpack.c.l.b16 %v1853
        %v1934 = vunpack.c.l.b16 %v1854
        %v1935 = vunpack.c.l.b16 %v1855
        %v1936 = vunpack.c.l.b16 %v1856
        %v1937 = vunpack.c.l.b16 %v1857
        %v1938 = vunpack.c.l.b16 %v1858
        %v1939 = vunpack.c.l.b16 %v1859
        %v1940 = vunpack.c.l.b16 %v1860
        %v1941 = vunpack.c.l.b16 %v1861
        %v1942 = vunpack.c.l.b16 %v1862
        %v1943 = vunpack.c.l.b16 %v1863
        %v1944 = vunpack.c.l.b16 %v1864
        %v1945 = vunpack.c.l.b16 %v1865
        %v1946 = vunpack.c.l.b16 %v1866
        %v1947 = vunpack.c.l.b16 %v1867
        %v1948 = vunpack.c.l.b16 %v1868
        %v1949 = vunpack.c.l.b16 %v1869
        %v1950 = vunpack.c.l.b16 %v1870
        %v1951 = vunpack.c.l.b16 %v1871
        %v1952 = vunpack.c.l.b16 %v1872
        %v1953 = vunpack.c.l.b16 %v1873
        %v1954 = vunpack.c.l.b16 %v1874
        %v1955 = vunpack.c.l.b16 %v1875
        %v1956 = vpack.c.b16 %v1925, %v1924
        %v1957 = vpack.c.b16 %v1927, %v1926
        %v1958 = vpack.c.b16 %v1929, %v1928
        %v1959 = vpack.c.b16 %v1931, %v1930
        %v1960 = vpack.c.b16 %v1933, %v1932
        %v1961 = vpack.c.b16 %v1935, %v1934
        %v1962 = vpack.c.b16 %v1937, %v1936
        %v1963 = vpack.c.b16 %v1939, %v1938
        %v1964 = vpack.c.b16 %v1941, %v1940
        %v1965 = vpack.c.b16 %v1943, %v1942
        %v1966 = vpack.c.b16 %v1945, %v1944
        %v1967 = vpack.c.b16 %v1947, %v1946
        %v1968 = vpack.c.b16 %v1949, %v1948
        %v1969 = vpack.c.b16 %v1951, %v1950
        %v1970 = vpack.c.b16 %v1953, %v1952
        %v1971 = vpack.c.b16 %v1955, %v1954
        %v2004 = vunpack.c.l.b16 %v1876
        %v2005 = vunpack.c.l.b16 %v1877
        %v2006 = vunpack.c.l.b16 %v1878
        %v2007 = vunpack.c.l.b16 %v1879
        %v2008 = vunpack.c.l.b16 %v1880
        %v2009 = vunpack.c.l.b16 %v1881
        %v2010 = vunpack.c.l.b16 %v1882
        %v2011 = vunpack.c.l.b16 %v1883
        %v2012 = vunpack.c.l.b16 %v1884
        %v2013 = vunpack.c.l.b16 %v1885
        %v2014 = vunpack.c.l.b16 %v1886
        %v2015 = vunpack.c.l.b16 %v1887
        %v2016 = vunpack.c.l.b16 %v1888
        %v2017 = vunpack.c.l.b16 %v1889
        %v2018 = vunpack.c.l.b16 %v1890
        %v2019 = vunpack.c.l.b16 %v1891
        %v2020 = vpack.c.b16 %v2005, %v2004
        %v2021 = vpack.c.b16 %v2007, %v2006
        %v2022 = vpack.c.b16 %v2009, %v2008
        %v2023 = vpack.c.b16 %v2011, %v2010
        %v2024 = vpack.c.b16 %v2013, %v2012
        %v2025 = vpack.c.b16 %v2015, %v2014
        %v2026 = vpack.c.b16 %v2017, %v2016
        %v2027 = vpack.c.b16 %v2019, %v2018
        %2036 = vmatpush.bf16.msra.mxu0 %v2027
        %2037 = vmatpush.bf16.msra.mxu0 %v2026
        %2038 = vmatpush.bf16.msra.mxu0 %v2025
        %2039 = vmatpush.bf16.msra.mxu0 %v2024
        %2040 = vmatpush.bf16.msra.mxu0 %v2023
        %2041 = vmatpush.bf16.msra.mxu0 %v2022
        %2042 = vmatpush.bf16.msra.mxu0 %v2021
        %2043 = vmatpush.bf16.msra.mxu0 %v2020
        %2044 = vmatmul.bf16.gmra.mxu0 %v1956
        %v2045 = vpop.f32.mrf.mxu0
        %v2046 = vadd.f32 0.0, %v2045
        %v2047 = vpop.f32.mrf.mxu0
        %v2048 = vadd.f32 0.0, %v2047
        %2049 = vmatmul.bf16.gmra.mxu0 %v1957
        %v2050 = vpop.f32.mrf.mxu0
        %v2051 = vadd.f32 0.0, %v2050
        %v2052 = vpop.f32.mrf.mxu0
        %v2053 = vadd.f32 0.0, %v2052
        %2054 = vmatmul.bf16.gmra.mxu0 %v1958
        %v2055 = vpop.f32.mrf.mxu0
        %v2056 = vadd.f32 0.0, %v2055
        %v2057 = vpop.f32.mrf.mxu0
        %v2058 = vadd.f32 0.0, %v2057
        %2059 = vmatmul.bf16.gmra.mxu0 %v1959
        %v2060 = vpop.f32.mrf.mxu0
        %v2061 = vadd.f32 0.0, %v2060
        %v2062 = vpop.f32.mrf.mxu0
        %v2063 = vadd.f32 0.0, %v2062
        %2064 = vmatmul.bf16.gmra.mxu0 %v1960
        %v2065 = vpop.f32.mrf.mxu0
        %v2066 = vadd.f32 0.0, %v2065
        %v2067 = vpop.f32.mrf.mxu0
        %v2068 = vadd.f32 0.0, %v2067
        %2069 = vmatmul.bf16.gmra.mxu0 %v1961
        %v2070 = vpop.f32.mrf.mxu0
        %v2071 = vadd.f32 0.0, %v2070
        %v2072 = vpop.f32.mrf.mxu0
        %v2073 = vadd.f32 0.0, %v2072
        %2074 = vmatmul.bf16.gmra.mxu0 %v1962
        %v2075 = vpop.f32.mrf.mxu0
        %v2076 = vadd.f32 0.0, %v2075
        %v2077 = vpop.f32.mrf.mxu0
        %v2078 = vadd.f32 0.0, %v2077
        %2079 = vmatmul.bf16.gmra.mxu0 %v1963
        %v2080 = vpop.f32.mrf.mxu0
        %v2081 = vadd.f32 0.0, %v2080
        %v2082 = vpop.f32.mrf.mxu0
        %v2083 = vadd.f32 0.0, %v2082
        %2084 = vmatmul.bf16.gmra.mxu0 %v1964
        %v2085 = vpop.f32.mrf.mxu0
        %v2086 = vadd.f32 0.0, %v2085
        %v2087 = vpop.f32.mrf.mxu0
        %v2088 = vadd.f32 0.0, %v2087
        %2089 = vmatmul.bf16.gmra.mxu0 %v1965
        %v2090 = vpop.f32.mrf.mxu0
        %v2091 = vadd.f32 0.0, %v2090
        %v2092 = vpop.f32.mrf.mxu0
        %v2093 = vadd.f32 0.0, %v2092
        %2094 = vmatmul.bf16.gmra.mxu0 %v1966
        %v2095 = vpop.f32.mrf.mxu0
        %v2096 = vadd.f32 0.0, %v2095
        %v2097 = vpop.f32.mrf.mxu0
        %v2098 = vadd.f32 0.0, %v2097
        %2099 = vmatmul.bf16.gmra.mxu0 %v1967
        %v2100 = vpop.f32.mrf.mxu0
        %v2101 = vadd.f32 0.0, %v2100
        %v2102 = vpop.f32.mrf.mxu0
        %v2103 = vadd.f32 0.0, %v2102
        %2104 = vmatmul.bf16.gmra.mxu0 %v1968
        %v2105 = vpop.f32.mrf.mxu0
        %v2106 = vadd.f32 0.0, %v2105
        %v2107 = vpop.f32.mrf.mxu0
        %v2108 = vadd.f32 0.0, %v2107
        %2109 = vmatmul.bf16.gmra.mxu0 %v1969
        %v2110 = vpop.f32.mrf.mxu0
        %v2111 = vadd.f32 0.0, %v2110
        %v2112 = vpop.f32.mrf.mxu0
        %v2113 = vadd.f32 0.0, %v2112
        %2114 = vmatmul.bf16.gmra.mxu0 %v1970
        %v2115 = vpop.f32.mrf.mxu0
        %v2116 = vadd.f32 0.0, %v2115
        %v2117 = vpop.f32.mrf.mxu0
        %v2118 = vadd.f32 0.0, %v2117
        %2119 = vmatmul.bf16.gmra.mxu0 %v1971
        %v2120 = vpop.f32.mrf.mxu0
        %v2121 = vadd.f32 0.0, %v2120
        %v2122 = vpop.f32.mrf.mxu0
        %v2123 = vadd.f32 0.0, %v2122
        %2124 = vdwg.mxu0
        %v2125 = vadd.f32 %v1812, %v2046
        %v2126 = vadd.f32 %v1813, %v2048
        %v2127 = vadd.f32 %v1814, %v2051
        %v2128 = vadd.f32 %v1815, %v2053
        %v2129 = vadd.f32 %v1816, %v2056
        %v2130 = vadd.f32 %v1817, %v2058
        %v2131 = vadd.f32 %v1818, %v2061
        %v2132 = vadd.f32 %v1819, %v2063
        %v2133 = vadd.f32 %v1820, %v2066
        %v2134 = vadd.f32 %v1821, %v2068
        %v2135 = vadd.f32 %v1822, %v2071
        %v2136 = vadd.f32 %v1823, %v2073
        %v2137 = vadd.f32 %v1824, %v2076
        %v2138 = vadd.f32 %v1825, %v2078
        %v2139 = vadd.f32 %v1826, %v2081
        %v2140 = vadd.f32 %v1827, %v2083
        %v2141 = vadd.f32 %v1828, %v2086
        %v2142 = vadd.f32 %v1829, %v2088
        %v2143 = vadd.f32 %v1830, %v2091
        %v2144 = vadd.f32 %v1831, %v2093
        %v2145 = vadd.f32 %v1832, %v2096
        %v2146 = vadd.f32 %v1833, %v2098
        %v2147 = vadd.f32 %v1834, %v2101
        %v2148 = vadd.f32 %v1835, %v2103
        %v2149 = vadd.f32 %v1836, %v2106
        %v2150 = vadd.f32 %v1837, %v2108
        %v2151 = vadd.f32 %v1838, %v2111
        %v2152 = vadd.f32 %v1839, %v2113
        %v2153 = vadd.f32 %v1840, %v2116
        %v2154 = vadd.f32 %v1841, %v2118
        %v2155 = vadd.f32 %v1842, %v2121
        %v2156 = vadd.f32 %v1843, %v2123
        %v2157 = vld [vmem:[%s280 + $0x10] sm:$0xf]
        %v2158 = vld [vmem:[%s280 + $0x14] sm:$0xf]
        %v2159 = vld [vmem:[%s280 + $0x18] sm:$0xf]
        %v2160 = vld [vmem:[%s280 + $0x1c] sm:$0xf]
        %v2161 = vld [vmem:[%s280 + $0x20] sm:$0xf]
        %v2162 = vld [vmem:[%s280 + $0x24] sm:$0xf]
        %v2163 = vld [vmem:[%s280 + $0x28] sm:$0xf]
        %v2164 = vld [vmem:[%s280 + $0x2c] sm:$0xf]
        %v2165 = vld [vmem:[%s280 + $0x30] sm:$0xf]
        %v2166 = vld [vmem:[%s280 + $0x34] sm:$0xf]
        %v2167 = vld [vmem:[%s280 + $0x38] sm:$0xf]
        %v2168 = vld [vmem:[%s280 + $0x3c] sm:$0xf]
        %v2169 = vld [vmem:[%s280 + $0x40] sm:$0xf]
        %v2170 = vld [vmem:[%s280 + $0x44] sm:$0xf]
        %v2171 = vld [vmem:[%s280 + $0x48] sm:$0xf]
        %v2172 = vld [vmem:[%s280 + $0x4c] sm:$0xf]
        %v2173 = vld [vmem:[%s280 + $0x50] sm:$0xf]
        %v2174 = vld [vmem:[%s280 + $0x54] sm:$0xf]
        %v2175 = vld [vmem:[%s280 + $0x58] sm:$0xf]
        %v2176 = vld [vmem:[%s280 + $0x5c] sm:$0xf]
        %v2177 = vld [vmem:[%s280 + $0x60] sm:$0xf]
        %v2178 = vld [vmem:[%s280 + $0x64] sm:$0xf]
        %v2179 = vld [vmem:[%s280 + $0x68] sm:$0xf]
        %v2180 = vld [vmem:[%s280 + $0x6c] sm:$0xf]
        %v2181 = vld [vmem:[%s280 + $0x70] sm:$0xf]
        %v2182 = vld [vmem:[%s280 + $0x74] sm:$0xf]
        %v2183 = vld [vmem:[%s280 + $0x78] sm:$0xf]
        %v2184 = vld [vmem:[%s280 + $0x7c] sm:$0xf]
        %v2185 = vld [vmem:[%s280 + $0x80] sm:$0xf]
        %v2186 = vld [vmem:[%s280 + $0x84] sm:$0xf]
        %v2187 = vld [vmem:[%s280 + $0x88] sm:$0xf]
        %v2188 = vld [vmem:[%s280 + $0x8c] sm:$0xf]
        %v2189 = vld [vmem:[#allocation8 + $0x180] sm:$0xf]
        %v2190 = vld [vmem:[#allocation8 + $0x184] sm:$0xf]
        %v2191 = vld [vmem:[#allocation8 + $0x188] sm:$0xf]
        %v2192 = vld [vmem:[#allocation8 + $0x18c] sm:$0xf]
        %v2193 = vld [vmem:[#allocation8 + $0x190] sm:$0xf]
        %v2194 = vld [vmem:[#allocation8 + $0x194] sm:$0xf]
        %v2195 = vld [vmem:[#allocation8 + $0x198] sm:$0xf]
        %v2196 = vld [vmem:[#allocation8 + $0x19c] sm:$0xf]
        %v2197 = vld [vmem:[#allocation8 + $0x1a0] sm:$0xf]
        %v2198 = vld [vmem:[#allocation8 + $0x1a4] sm:$0xf]
        %v2199 = vld [vmem:[#allocation8 + $0x1a8] sm:$0xf]
        %v2200 = vld [vmem:[#allocation8 + $0x1ac] sm:$0xf]
        %v2201 = vld [vmem:[#allocation8 + $0x1b0] sm:$0xf]
        %v2202 = vld [vmem:[#allocation8 + $0x1b4] sm:$0xf]
        %v2203 = vld [vmem:[#allocation8 + $0x1b8] sm:$0xf]
        %v2204 = vld [vmem:[#allocation8 + $0x1bc] sm:$0xf]
        %v2237 = vunpack.c.l.b16 %v2157
        %v2238 = vunpack.c.l.b16 %v2158
        %v2239 = vunpack.c.l.b16 %v2159
        %v2240 = vunpack.c.l.b16 %v2160
        %v2241 = vunpack.c.l.b16 %v2161
        %v2242 = vunpack.c.l.b16 %v2162
        %v2243 = vunpack.c.l.b16 %v2163
        %v2244 = vunpack.c.l.b16 %v2164
        %v2245 = vunpack.c.l.b16 %v2165
        %v2246 = vunpack.c.l.b16 %v2166
        %v2247 = vunpack.c.l.b16 %v2167
        %v2248 = vunpack.c.l.b16 %v2168
        %v2249 = vunpack.c.l.b16 %v2169
        %v2250 = vunpack.c.l.b16 %v2170
        %v2251 = vunpack.c.l.b16 %v2171
        %v2252 = vunpack.c.l.b16 %v2172
        %v2253 = vunpack.c.l.b16 %v2173
        %v2254 = vunpack.c.l.b16 %v2174
        %v2255 = vunpack.c.l.b16 %v2175
        %v2256 = vunpack.c.l.b16 %v2176
        %v2257 = vunpack.c.l.b16 %v2177
        %v2258 = vunpack.c.l.b16 %v2178
        %v2259 = vunpack.c.l.b16 %v2179
        %v2260 = vunpack.c.l.b16 %v2180
        %v2261 = vunpack.c.l.b16 %v2181
        %v2262 = vunpack.c.l.b16 %v2182
        %v2263 = vunpack.c.l.b16 %v2183
        %v2264 = vunpack.c.l.b16 %v2184
        %v2265 = vunpack.c.l.b16 %v2185
        %v2266 = vunpack.c.l.b16 %v2186
        %v2267 = vunpack.c.l.b16 %v2187
        %v2268 = vunpack.c.l.b16 %v2188
        %v2269 = vpack.c.b16 %v2238, %v2237
        %v2270 = vpack.c.b16 %v2240, %v2239
        %v2271 = vpack.c.b16 %v2242, %v2241
        %v2272 = vpack.c.b16 %v2244, %v2243
        %v2273 = vpack.c.b16 %v2246, %v2245
        %v2274 = vpack.c.b16 %v2248, %v2247
        %v2275 = vpack.c.b16 %v2250, %v2249
        %v2276 = vpack.c.b16 %v2252, %v2251
        %v2277 = vpack.c.b16 %v2254, %v2253
        %v2278 = vpack.c.b16 %v2256, %v2255
        %v2279 = vpack.c.b16 %v2258, %v2257
        %v2280 = vpack.c.b16 %v2260, %v2259
        %v2281 = vpack.c.b16 %v2262, %v2261
        %v2282 = vpack.c.b16 %v2264, %v2263
        %v2283 = vpack.c.b16 %v2266, %v2265
        %v2284 = vpack.c.b16 %v2268, %v2267
        %v2317 = vunpack.c.l.b16 %v2189
        %v2318 = vunpack.c.l.b16 %v2190
        %v2319 = vunpack.c.l.b16 %v2191
        %v2320 = vunpack.c.l.b16 %v2192
        %v2321 = vunpack.c.l.b16 %v2193
        %v2322 = vunpack.c.l.b16 %v2194
        %v2323 = vunpack.c.l.b16 %v2195
        %v2324 = vunpack.c.l.b16 %v2196
        %v2325 = vunpack.c.l.b16 %v2197
        %v2326 = vunpack.c.l.b16 %v2198
        %v2327 = vunpack.c.l.b16 %v2199
        %v2328 = vunpack.c.l.b16 %v2200
        %v2329 = vunpack.c.l.b16 %v2201
        %v2330 = vunpack.c.l.b16 %v2202
        %v2331 = vunpack.c.l.b16 %v2203
        %v2332 = vunpack.c.l.b16 %v2204
        %v2333 = vpack.c.b16 %v2318, %v2317
        %v2334 = vpack.c.b16 %v2320, %v2319
        %v2335 = vpack.c.b16 %v2322, %v2321
        %v2336 = vpack.c.b16 %v2324, %v2323
        %v2337 = vpack.c.b16 %v2326, %v2325
        %v2338 = vpack.c.b16 %v2328, %v2327
        %v2339 = vpack.c.b16 %v2330, %v2329
        %v2340 = vpack.c.b16 %v2332, %v2331
        %2349 = vmatpush.bf16.msra.mxu0 %v2340
        %2350 = vmatpush.bf16.msra.mxu0 %v2339
        %2351 = vmatpush.bf16.msra.mxu0 %v2338
        %2352 = vmatpush.bf16.msra.mxu0 %v2337
        %2353 = vmatpush.bf16.msra.mxu0 %v2336
        %2354 = vmatpush.bf16.msra.mxu0 %v2335
        %2355 = vmatpush.bf16.msra.mxu0 %v2334
        %2356 = vmatpush.bf16.msra.mxu0 %v2333
        %2357 = vmatmul.bf16.gmra.mxu0 %v2269
        %v2358 = vpop.f32.mrf.mxu0
        %v2359 = vadd.f32 0.0, %v2358
        %v2360 = vpop.f32.mrf.mxu0
        %v2361 = vadd.f32 0.0, %v2360
        %2362 = vmatmul.bf16.gmra.mxu0 %v2270
        %v2363 = vpop.f32.mrf.mxu0
        %v2364 = vadd.f32 0.0, %v2363
        %v2365 = vpop.f32.mrf.mxu0
        %v2366 = vadd.f32 0.0, %v2365
        %2367 = vmatmul.bf16.gmra.mxu0 %v2271
        %v2368 = vpop.f32.mrf.mxu0
        %v2369 = vadd.f32 0.0, %v2368
        %v2370 = vpop.f32.mrf.mxu0
        %v2371 = vadd.f32 0.0, %v2370
        %2372 = vmatmul.bf16.gmra.mxu0 %v2272
        %v2373 = vpop.f32.mrf.mxu0
        %v2374 = vadd.f32 0.0, %v2373
        %v2375 = vpop.f32.mrf.mxu0
        %v2376 = vadd.f32 0.0, %v2375
        %2377 = vmatmul.bf16.gmra.mxu0 %v2273
        %v2378 = vpop.f32.mrf.mxu0
        %v2379 = vadd.f32 0.0, %v2378
        %v2380 = vpop.f32.mrf.mxu0
        %v2381 = vadd.f32 0.0, %v2380
        %2382 = vmatmul.bf16.gmra.mxu0 %v2274
        %v2383 = vpop.f32.mrf.mxu0
        %v2384 = vadd.f32 0.0, %v2383
        %v2385 = vpop.f32.mrf.mxu0
        %v2386 = vadd.f32 0.0, %v2385
        %2387 = vmatmul.bf16.gmra.mxu0 %v2275
        %v2388 = vpop.f32.mrf.mxu0
        %v2389 = vadd.f32 0.0, %v2388
        %v2390 = vpop.f32.mrf.mxu0
        %v2391 = vadd.f32 0.0, %v2390
        %2392 = vmatmul.bf16.gmra.mxu0 %v2276
        %v2393 = vpop.f32.mrf.mxu0
        %v2394 = vadd.f32 0.0, %v2393
        %v2395 = vpop.f32.mrf.mxu0
        %v2396 = vadd.f32 0.0, %v2395
        %2397 = vmatmul.bf16.gmra.mxu0 %v2277
        %v2398 = vpop.f32.mrf.mxu0
        %v2399 = vadd.f32 0.0, %v2398
        %v2400 = vpop.f32.mrf.mxu0
        %v2401 = vadd.f32 0.0, %v2400
        %2402 = vmatmul.bf16.gmra.mxu0 %v2278
        %v2403 = vpop.f32.mrf.mxu0
        %v2404 = vadd.f32 0.0, %v2403
        %v2405 = vpop.f32.mrf.mxu0
        %v2406 = vadd.f32 0.0, %v2405
        %2407 = vmatmul.bf16.gmra.mxu0 %v2279
        %v2408 = vpop.f32.mrf.mxu0
        %v2409 = vadd.f32 0.0, %v2408
        %v2410 = vpop.f32.mrf.mxu0
        %v2411 = vadd.f32 0.0, %v2410
        %2412 = vmatmul.bf16.gmra.mxu0 %v2280
        %v2413 = vpop.f32.mrf.mxu0
        %v2414 = vadd.f32 0.0, %v2413
        %v2415 = vpop.f32.mrf.mxu0
        %v2416 = vadd.f32 0.0, %v2415
        %2417 = vmatmul.bf16.gmra.mxu0 %v2281
        %v2418 = vpop.f32.mrf.mxu0
        %v2419 = vadd.f32 0.0, %v2418
        %v2420 = vpop.f32.mrf.mxu0
        %v2421 = vadd.f32 0.0, %v2420
        %2422 = vmatmul.bf16.gmra.mxu0 %v2282
        %v2423 = vpop.f32.mrf.mxu0
        %v2424 = vadd.f32 0.0, %v2423
        %v2425 = vpop.f32.mrf.mxu0
        %v2426 = vadd.f32 0.0, %v2425
        %2427 = vmatmul.bf16.gmra.mxu0 %v2283
        %v2428 = vpop.f32.mrf.mxu0
        %v2429 = vadd.f32 0.0, %v2428
        %v2430 = vpop.f32.mrf.mxu0
        %v2431 = vadd.f32 0.0, %v2430
        %2432 = vmatmul.bf16.gmra.mxu0 %v2284
        %v2433 = vpop.f32.mrf.mxu0
        %v2434 = vadd.f32 0.0, %v2433
        %v2435 = vpop.f32.mrf.mxu0
        %v2436 = vadd.f32 0.0, %v2435
        %2437 = vdwg.mxu0
        %v2438 = vadd.f32 %v2125, %v2359
        %v2439 = vadd.f32 %v2126, %v2361
        %v2440 = vadd.f32 %v2127, %v2364
        %v2441 = vadd.f32 %v2128, %v2366
        %v2442 = vadd.f32 %v2129, %v2369
        %v2443 = vadd.f32 %v2130, %v2371
        %v2444 = vadd.f32 %v2131, %v2374
        %v2445 = vadd.f32 %v2132, %v2376
        %v2446 = vadd.f32 %v2133, %v2379
        %v2447 = vadd.f32 %v2134, %v2381
        %v2448 = vadd.f32 %v2135, %v2384
        %v2449 = vadd.f32 %v2136, %v2386
        %v2450 = vadd.f32 %v2137, %v2389
        %v2451 = vadd.f32 %v2138, %v2391
        %v2452 = vadd.f32 %v2139, %v2394
        %v2453 = vadd.f32 %v2140, %v2396
        %v2454 = vadd.f32 %v2141, %v2399
        %v2455 = vadd.f32 %v2142, %v2401
        %v2456 = vadd.f32 %v2143, %v2404
        %v2457 = vadd.f32 %v2144, %v2406
        %v2458 = vadd.f32 %v2145, %v2409
        %v2459 = vadd.f32 %v2146, %v2411
        %v2460 = vadd.f32 %v2147, %v2414
        %v2461 = vadd.f32 %v2148, %v2416
        %v2462 = vadd.f32 %v2149, %v2419
        %v2463 = vadd.f32 %v2150, %v2421
        %v2464 = vadd.f32 %v2151, %v2424
        %v2465 = vadd.f32 %v2152, %v2426
        %v2466 = vadd.f32 %v2153, %v2429
        %v2467 = vadd.f32 %v2154, %v2431
        %v2468 = vadd.f32 %v2155, %v2434
        %v2469 = vadd.f32 %v2156, %v2436
        %v2470 = vld [vmem:[%s290 + $0x10] sm:$0xf]
        %v2471 = vld [vmem:[%s290 + $0x14] sm:$0xf]
        %v2472 = vld [vmem:[%s290 + $0x18] sm:$0xf]
        %v2473 = vld [vmem:[%s290 + $0x1c] sm:$0xf]
        %v2474 = vld [vmem:[%s290 + $0x20] sm:$0xf]
        %v2475 = vld [vmem:[%s290 + $0x24] sm:$0xf]
        %v2476 = vld [vmem:[%s290 + $0x28] sm:$0xf]
        %v2477 = vld [vmem:[%s290 + $0x2c] sm:$0xf]
        %v2478 = vld [vmem:[%s290 + $0x30] sm:$0xf]
        %v2479 = vld [vmem:[%s290 + $0x34] sm:$0xf]
        %v2480 = vld [vmem:[%s290 + $0x38] sm:$0xf]
        %v2481 = vld [vmem:[%s290 + $0x3c] sm:$0xf]
        %v2482 = vld [vmem:[%s290 + $0x40] sm:$0xf]
        %v2483 = vld [vmem:[%s290 + $0x44] sm:$0xf]
        %v2484 = vld [vmem:[%s290 + $0x48] sm:$0xf]
        %v2485 = vld [vmem:[%s290 + $0x4c] sm:$0xf]
        %v2486 = vld [vmem:[%s290 + $0x50] sm:$0xf]
        %v2487 = vld [vmem:[%s290 + $0x54] sm:$0xf]
        %v2488 = vld [vmem:[%s290 + $0x58] sm:$0xf]
        %v2489 = vld [vmem:[%s290 + $0x5c] sm:$0xf]
        %v2490 = vld [vmem:[%s290 + $0x60] sm:$0xf]
        %v2491 = vld [vmem:[%s290 + $0x64] sm:$0xf]
        %v2492 = vld [vmem:[%s290 + $0x68] sm:$0xf]
        %v2493 = vld [vmem:[%s290 + $0x6c] sm:$0xf]
        %v2494 = vld [vmem:[%s290 + $0x70] sm:$0xf]
        %v2495 = vld [vmem:[%s290 + $0x74] sm:$0xf]
        %v2496 = vld [vmem:[%s290 + $0x78] sm:$0xf]
        %v2497 = vld [vmem:[%s290 + $0x7c] sm:$0xf]
        %v2498 = vld [vmem:[%s290 + $0x80] sm:$0xf]
        %v2499 = vld [vmem:[%s290 + $0x84] sm:$0xf]
        %v2500 = vld [vmem:[%s290 + $0x88] sm:$0xf]
        %v2501 = vld [vmem:[%s290 + $0x8c] sm:$0xf]
        %v2502 = vld [vmem:[#allocation8 + $0x1c0] sm:$0xf]
        %v2503 = vld [vmem:[#allocation8 + $0x1c4] sm:$0xf]
        %v2504 = vld [vmem:[#allocation8 + $0x1c8] sm:$0xf]
        %v2505 = vld [vmem:[#allocation8 + $0x1cc] sm:$0xf]
        %v2506 = vld [vmem:[#allocation8 + $0x1d0] sm:$0xf]
        %v2507 = vld [vmem:[#allocation8 + $0x1d4] sm:$0xf]
        %v2508 = vld [vmem:[#allocation8 + $0x1d8] sm:$0xf]
        %v2509 = vld [vmem:[#allocation8 + $0x1dc] sm:$0xf]
        %v2510 = vld [vmem:[#allocation8 + $0x1e0] sm:$0xf]
        %v2511 = vld [vmem:[#allocation8 + $0x1e4] sm:$0xf]
        %v2512 = vld [vmem:[#allocation8 + $0x1e8] sm:$0xf]
        %v2513 = vld [vmem:[#allocation8 + $0x1ec] sm:$0xf]
        %v2514 = vld [vmem:[#allocation8 + $0x1f0] sm:$0xf]
        %v2515 = vld [vmem:[#allocation8 + $0x1f4] sm:$0xf]
        %v2516 = vld [vmem:[#allocation8 + $0x1f8] sm:$0xf]
        %v2517 = vld [vmem:[#allocation8 + $0x1fc] sm:$0xf]
        %v2550 = vunpack.c.l.b16 %v2470
        %v2551 = vunpack.c.l.b16 %v2471
        %v2552 = vunpack.c.l.b16 %v2472
        %v2553 = vunpack.c.l.b16 %v2473
        %v2554 = vunpack.c.l.b16 %v2474
        %v2555 = vunpack.c.l.b16 %v2475
        %v2556 = vunpack.c.l.b16 %v2476
        %v2557 = vunpack.c.l.b16 %v2477
        %v2558 = vunpack.c.l.b16 %v2478
        %v2559 = vunpack.c.l.b16 %v2479
        %v2560 = vunpack.c.l.b16 %v2480
        %v2561 = vunpack.c.l.b16 %v2481
        %v2562 = vunpack.c.l.b16 %v2482
        %v2563 = vunpack.c.l.b16 %v2483
        %v2564 = vunpack.c.l.b16 %v2484
        %v2565 = vunpack.c.l.b16 %v2485
        %v2566 = vunpack.c.l.b16 %v2486
        %v2567 = vunpack.c.l.b16 %v2487
        %v2568 = vunpack.c.l.b16 %v2488
        %v2569 = vunpack.c.l.b16 %v2489
        %v2570 = vunpack.c.l.b16 %v2490
        %v2571 = vunpack.c.l.b16 %v2491
        %v2572 = vunpack.c.l.b16 %v2492
        %v2573 = vunpack.c.l.b16 %v2493
        %v2574 = vunpack.c.l.b16 %v2494
        %v2575 = vunpack.c.l.b16 %v2495
        %v2576 = vunpack.c.l.b16 %v2496
        %v2577 = vunpack.c.l.b16 %v2497
        %v2578 = vunpack.c.l.b16 %v2498
        %v2579 = vunpack.c.l.b16 %v2499
        %v2580 = vunpack.c.l.b16 %v2500
        %v2581 = vunpack.c.l.b16 %v2501
        %v2582 = vpack.c.b16 %v2551, %v2550
        %v2583 = vpack.c.b16 %v2553, %v2552
        %v2584 = vpack.c.b16 %v2555, %v2554
        %v2585 = vpack.c.b16 %v2557, %v2556
        %v2586 = vpack.c.b16 %v2559, %v2558
        %v2587 = vpack.c.b16 %v2561, %v2560
        %v2588 = vpack.c.b16 %v2563, %v2562
        %v2589 = vpack.c.b16 %v2565, %v2564
        %v2590 = vpack.c.b16 %v2567, %v2566
        %v2591 = vpack.c.b16 %v2569, %v2568
        %v2592 = vpack.c.b16 %v2571, %v2570
        %v2593 = vpack.c.b16 %v2573, %v2572
        %v2594 = vpack.c.b16 %v2575, %v2574
        %v2595 = vpack.c.b16 %v2577, %v2576
        %v2596 = vpack.c.b16 %v2579, %v2578
        %v2597 = vpack.c.b16 %v2581, %v2580
        %v2630 = vunpack.c.l.b16 %v2502
        %v2631 = vunpack.c.l.b16 %v2503
        %v2632 = vunpack.c.l.b16 %v2504
        %v2633 = vunpack.c.l.b16 %v2505
        %v2634 = vunpack.c.l.b16 %v2506
        %v2635 = vunpack.c.l.b16 %v2507
        %v2636 = vunpack.c.l.b16 %v2508
        %v2637 = vunpack.c.l.b16 %v2509
        %v2638 = vunpack.c.l.b16 %v2510
        %v2639 = vunpack.c.l.b16 %v2511
        %v2640 = vunpack.c.l.b16 %v2512
        %v2641 = vunpack.c.l.b16 %v2513
        %v2642 = vunpack.c.l.b16 %v2514
        %v2643 = vunpack.c.l.b16 %v2515
        %v2644 = vunpack.c.l.b16 %v2516
        %v2645 = vunpack.c.l.b16 %v2517
        %v2646 = vpack.c.b16 %v2631, %v2630
        %v2647 = vpack.c.b16 %v2633, %v2632
        %v2648 = vpack.c.b16 %v2635, %v2634
        %v2649 = vpack.c.b16 %v2637, %v2636
        %v2650 = vpack.c.b16 %v2639, %v2638
        %v2651 = vpack.c.b16 %v2641, %v2640
        %v2652 = vpack.c.b16 %v2643, %v2642
        %v2653 = vpack.c.b16 %v2645, %v2644
        %2662 = vmatpush.bf16.msra.mxu0 %v2653
        %2663 = vmatpush.bf16.msra.mxu0 %v2652
        %2664 = vmatpush.bf16.msra.mxu0 %v2651
        %2665 = vmatpush.bf16.msra.mxu0 %v2650
        %2666 = vmatpush.bf16.msra.mxu0 %v2649
        %2667 = vmatpush.bf16.msra.mxu0 %v2648
        %2668 = vmatpush.bf16.msra.mxu0 %v2647
        %2669 = vmatpush.bf16.msra.mxu0 %v2646
        %2670 = vmatmul.bf16.gmra.mxu0 %v2582
        %v2671 = vpop.f32.mrf.mxu0
        %v2672 = vadd.f32 0.0, %v2671
        %v2673 = vpop.f32.mrf.mxu0
        %v2674 = vadd.f32 0.0, %v2673
        %2675 = vmatmul.bf16.gmra.mxu0 %v2583
        %v2676 = vpop.f32.mrf.mxu0
        %v2677 = vadd.f32 0.0, %v2676
        %v2678 = vpop.f32.mrf.mxu0
        %v2679 = vadd.f32 0.0, %v2678
        %2680 = vmatmul.bf16.gmra.mxu0 %v2584
        %v2681 = vpop.f32.mrf.mxu0
        %v2682 = vadd.f32 0.0, %v2681
        %v2683 = vpop.f32.mrf.mxu0
        %v2684 = vadd.f32 0.0, %v2683
        %2685 = vmatmul.bf16.gmra.mxu0 %v2585
        %v2686 = vpop.f32.mrf.mxu0
        %v2687 = vadd.f32 0.0, %v2686
        %v2688 = vpop.f32.mrf.mxu0
        %v2689 = vadd.f32 0.0, %v2688
        %2690 = vmatmul.bf16.gmra.mxu0 %v2586
        %v2691 = vpop.f32.mrf.mxu0
        %v2692 = vadd.f32 0.0, %v2691
        %v2693 = vpop.f32.mrf.mxu0
        %v2694 = vadd.f32 0.0, %v2693
        %2695 = vmatmul.bf16.gmra.mxu0 %v2587
        %v2696 = vpop.f32.mrf.mxu0
        %v2697 = vadd.f32 0.0, %v2696
        %v2698 = vpop.f32.mrf.mxu0
        %v2699 = vadd.f32 0.0, %v2698
        %2700 = vmatmul.bf16.gmra.mxu0 %v2588
        %v2701 = vpop.f32.mrf.mxu0
        %v2702 = vadd.f32 0.0, %v2701
        %v2703 = vpop.f32.mrf.mxu0
        %v2704 = vadd.f32 0.0, %v2703
        %2705 = vmatmul.bf16.gmra.mxu0 %v2589
        %v2706 = vpop.f32.mrf.mxu0
        %v2707 = vadd.f32 0.0, %v2706
        %v2708 = vpop.f32.mrf.mxu0
        %v2709 = vadd.f32 0.0, %v2708
        %2710 = vmatmul.bf16.gmra.mxu0 %v2590
        %v2711 = vpop.f32.mrf.mxu0
        %v2712 = vadd.f32 0.0, %v2711
        %v2713 = vpop.f32.mrf.mxu0
        %v2714 = vadd.f32 0.0, %v2713
        %2715 = vmatmul.bf16.gmra.mxu0 %v2591
        %v2716 = vpop.f32.mrf.mxu0
        %v2717 = vadd.f32 0.0, %v2716
        %v2718 = vpop.f32.mrf.mxu0
        %v2719 = vadd.f32 0.0, %v2718
        %2720 = vmatmul.bf16.gmra.mxu0 %v2592
        %v2721 = vpop.f32.mrf.mxu0
        %v2722 = vadd.f32 0.0, %v2721
        %v2723 = vpop.f32.mrf.mxu0
        %v2724 = vadd.f32 0.0, %v2723
        %2725 = vmatmul.bf16.gmra.mxu0 %v2593
        %v2726 = vpop.f32.mrf.mxu0
        %v2727 = vadd.f32 0.0, %v2726
        %v2728 = vpop.f32.mrf.mxu0
        %v2729 = vadd.f32 0.0, %v2728
        %2730 = vmatmul.bf16.gmra.mxu0 %v2594
        %v2731 = vpop.f32.mrf.mxu0
        %v2732 = vadd.f32 0.0, %v2731
        %v2733 = vpop.f32.mrf.mxu0
        %v2734 = vadd.f32 0.0, %v2733
        %2735 = vmatmul.bf16.gmra.mxu0 %v2595
        %v2736 = vpop.f32.mrf.mxu0
        %v2737 = vadd.f32 0.0, %v2736
        %v2738 = vpop.f32.mrf.mxu0
        %v2739 = vadd.f32 0.0, %v2738
        %2740 = vmatmul.bf16.gmra.mxu0 %v2596
        %v2741 = vpop.f32.mrf.mxu0
        %v2742 = vadd.f32 0.0, %v2741
        %v2743 = vpop.f32.mrf.mxu0
        %v2744 = vadd.f32 0.0, %v2743
        %2745 = vmatmul.bf16.gmra.mxu0 %v2597
        %v2746 = vpop.f32.mrf.mxu0
        %v2747 = vadd.f32 0.0, %v2746
        %v2748 = vpop.f32.mrf.mxu0
        %v2749 = vadd.f32 0.0, %v2748
        %2750 = vdwg.mxu0
        %v2751 = vadd.f32 %v2438, %v2672
        %v2752 = vadd.f32 %v2439, %v2674
        %v2753 = vadd.f32 %v2440, %v2677
        %v2754 = vadd.f32 %v2441, %v2679
        %v2755 = vadd.f32 %v2442, %v2682
        %v2756 = vadd.f32 %v2443, %v2684
        %v2757 = vadd.f32 %v2444, %v2687
        %v2758 = vadd.f32 %v2445, %v2689
        %v2759 = vadd.f32 %v2446, %v2692
        %v2760 = vadd.f32 %v2447, %v2694
        %v2761 = vadd.f32 %v2448, %v2697
        %v2762 = vadd.f32 %v2449, %v2699
        %v2763 = vadd.f32 %v2450, %v2702
        %v2764 = vadd.f32 %v2451, %v2704
        %v2765 = vadd.f32 %v2452, %v2707
        %v2766 = vadd.f32 %v2453, %v2709
        %v2767 = vadd.f32 %v2454, %v2712
        %v2768 = vadd.f32 %v2455, %v2714
        %v2769 = vadd.f32 %v2456, %v2717
        %v2770 = vadd.f32 %v2457, %v2719
        %v2771 = vadd.f32 %v2458, %v2722
        %v2772 = vadd.f32 %v2459, %v2724
        %v2773 = vadd.f32 %v2460, %v2727
        %v2774 = vadd.f32 %v2461, %v2729
        %v2775 = vadd.f32 %v2462, %v2732
        %v2776 = vadd.f32 %v2463, %v2734
        %v2777 = vadd.f32 %v2464, %v2737
        %v2778 = vadd.f32 %v2465, %v2739
        %v2779 = vadd.f32 %v2466, %v2742
        %v2780 = vadd.f32 %v2467, %v2744
        %v2781 = vadd.f32 %v2468, %v2747
        %v2782 = vadd.f32 %v2469, %v2749
        %v2783 = vld [vmem:[%s300 + $0x10] sm:$0xf]
        %v2784 = vld [vmem:[%s300 + $0x14] sm:$0xf]
        %v2785 = vld [vmem:[%s300 + $0x18] sm:$0xf]
        %v2786 = vld [vmem:[%s300 + $0x1c] sm:$0xf]
        %v2787 = vld [vmem:[%s300 + $0x20] sm:$0xf]
        %v2788 = vld [vmem:[%s300 + $0x24] sm:$0xf]
        %v2789 = vld [vmem:[%s300 + $0x28] sm:$0xf]
        %v2790 = vld [vmem:[%s300 + $0x2c] sm:$0xf]
        %v2791 = vld [vmem:[%s300 + $0x30] sm:$0xf]
        %v2792 = vld [vmem:[%s300 + $0x34] sm:$0xf]
        %v2793 = vld [vmem:[%s300 + $0x38] sm:$0xf]
        %v2794 = vld [vmem:[%s300 + $0x3c] sm:$0xf]
        %v2795 = vld [vmem:[%s300 + $0x40] sm:$0xf]
        %v2796 = vld [vmem:[%s300 + $0x44] sm:$0xf]
        %v2797 = vld [vmem:[%s300 + $0x48] sm:$0xf]
        %v2798 = vld [vmem:[%s300 + $0x4c] sm:$0xf]
        %v2799 = vld [vmem:[%s300 + $0x50] sm:$0xf]
        %v2800 = vld [vmem:[%s300 + $0x54] sm:$0xf]
        %v2801 = vld [vmem:[%s300 + $0x58] sm:$0xf]
        %v2802 = vld [vmem:[%s300 + $0x5c] sm:$0xf]
        %v2803 = vld [vmem:[%s300 + $0x60] sm:$0xf]
        %v2804 = vld [vmem:[%s300 + $0x64] sm:$0xf]
        %v2805 = vld [vmem:[%s300 + $0x68] sm:$0xf]
        %v2806 = vld [vmem:[%s300 + $0x6c] sm:$0xf]
        %v2807 = vld [vmem:[%s300 + $0x70] sm:$0xf]
        %v2808 = vld [vmem:[%s300 + $0x74] sm:$0xf]
        %v2809 = vld [vmem:[%s300 + $0x78] sm:$0xf]
        %v2810 = vld [vmem:[%s300 + $0x7c] sm:$0xf]
        %v2811 = vld [vmem:[%s300 + $0x80] sm:$0xf]
        %v2812 = vld [vmem:[%s300 + $0x84] sm:$0xf]
        %v2813 = vld [vmem:[%s300 + $0x88] sm:$0xf]
        %v2814 = vld [vmem:[%s300 + $0x8c] sm:$0xf]
        %v2815 = vld [vmem:[#allocation8 + $0x200] sm:$0xf]
        %v2816 = vld [vmem:[#allocation8 + $0x204] sm:$0xf]
        %v2817 = vld [vmem:[#allocation8 + $0x208] sm:$0xf]
        %v2818 = vld [vmem:[#allocation8 + $0x20c] sm:$0xf]
        %v2819 = vld [vmem:[#allocation8 + $0x210] sm:$0xf]
        %v2820 = vld [vmem:[#allocation8 + $0x214] sm:$0xf]
        %v2821 = vld [vmem:[#allocation8 + $0x218] sm:$0xf]
        %v2822 = vld [vmem:[#allocation8 + $0x21c] sm:$0xf]
        %v2823 = vld [vmem:[#allocation8 + $0x220] sm:$0xf]
        %v2824 = vld [vmem:[#allocation8 + $0x224] sm:$0xf]
        %v2825 = vld [vmem:[#allocation8 + $0x228] sm:$0xf]
        %v2826 = vld [vmem:[#allocation8 + $0x22c] sm:$0xf]
        %v2827 = vld [vmem:[#allocation8 + $0x230] sm:$0xf]
        %v2828 = vld [vmem:[#allocation8 + $0x234] sm:$0xf]
        %v2829 = vld [vmem:[#allocation8 + $0x238] sm:$0xf]
        %v2830 = vld [vmem:[#allocation8 + $0x23c] sm:$0xf]
        %v2863 = vunpack.c.l.b16 %v2783
        %v2864 = vunpack.c.l.b16 %v2784
        %v2865 = vunpack.c.l.b16 %v2785
        %v2866 = vunpack.c.l.b16 %v2786
        %v2867 = vunpack.c.l.b16 %v2787
        %v2868 = vunpack.c.l.b16 %v2788
        %v2869 = vunpack.c.l.b16 %v2789
        %v2870 = vunpack.c.l.b16 %v2790
        %v2871 = vunpack.c.l.b16 %v2791
        %v2872 = vunpack.c.l.b16 %v2792
        %v2873 = vunpack.c.l.b16 %v2793
        %v2874 = vunpack.c.l.b16 %v2794
        %v2875 = vunpack.c.l.b16 %v2795
        %v2876 = vunpack.c.l.b16 %v2796
        %v2877 = vunpack.c.l.b16 %v2797
        %v2878 = vunpack.c.l.b16 %v2798
        %v2879 = vunpack.c.l.b16 %v2799
        %v2880 = vunpack.c.l.b16 %v2800
        %v2881 = vunpack.c.l.b16 %v2801
        %v2882 = vunpack.c.l.b16 %v2802
        %v2883 = vunpack.c.l.b16 %v2803
        %v2884 = vunpack.c.l.b16 %v2804
        %v2885 = vunpack.c.l.b16 %v2805
        %v2886 = vunpack.c.l.b16 %v2806
        %v2887 = vunpack.c.l.b16 %v2807
        %v2888 = vunpack.c.l.b16 %v2808
        %v2889 = vunpack.c.l.b16 %v2809
        %v2890 = vunpack.c.l.b16 %v2810
        %v2891 = vunpack.c.l.b16 %v2811
        %v2892 = vunpack.c.l.b16 %v2812
        %v2893 = vunpack.c.l.b16 %v2813
        %v2894 = vunpack.c.l.b16 %v2814
        %v2895 = vpack.c.b16 %v2864, %v2863
        %v2896 = vpack.c.b16 %v2866, %v2865
        %v2897 = vpack.c.b16 %v2868, %v2867
        %v2898 = vpack.c.b16 %v2870, %v2869
        %v2899 = vpack.c.b16 %v2872, %v2871
        %v2900 = vpack.c.b16 %v2874, %v2873
        %v2901 = vpack.c.b16 %v2876, %v2875
        %v2902 = vpack.c.b16 %v2878, %v2877
        %v2903 = vpack.c.b16 %v2880, %v2879
        %v2904 = vpack.c.b16 %v2882, %v2881
        %v2905 = vpack.c.b16 %v2884, %v2883
        %v2906 = vpack.c.b16 %v2886, %v2885
        %v2907 = vpack.c.b16 %v2888, %v2887
        %v2908 = vpack.c.b16 %v2890, %v2889
        %v2909 = vpack.c.b16 %v2892, %v2891
        %v2910 = vpack.c.b16 %v2894, %v2893
        %v2943 = vunpack.c.l.b16 %v2815
        %v2944 = vunpack.c.l.b16 %v2816
        %v2945 = vunpack.c.l.b16 %v2817
        %v2946 = vunpack.c.l.b16 %v2818
        %v2947 = vunpack.c.l.b16 %v2819
        %v2948 = vunpack.c.l.b16 %v2820
        %v2949 = vunpack.c.l.b16 %v2821
        %v2950 = vunpack.c.l.b16 %v2822
        %v2951 = vunpack.c.l.b16 %v2823
        %v2952 = vunpack.c.l.b16 %v2824
        %v2953 = vunpack.c.l.b16 %v2825
        %v2954 = vunpack.c.l.b16 %v2826
        %v2955 = vunpack.c.l.b16 %v2827
        %v2956 = vunpack.c.l.b16 %v2828
        %v2957 = vunpack.c.l.b16 %v2829
        %v2958 = vunpack.c.l.b16 %v2830
        %v2959 = vpack.c.b16 %v2944, %v2943
        %v2960 = vpack.c.b16 %v2946, %v2945
        %v2961 = vpack.c.b16 %v2948, %v2947
        %v2962 = vpack.c.b16 %v2950, %v2949
        %v2963 = vpack.c.b16 %v2952, %v2951
        %v2964 = vpack.c.b16 %v2954, %v2953
        %v2965 = vpack.c.b16 %v2956, %v2955
        %v2966 = vpack.c.b16 %v2958, %v2957
        %2975 = vmatpush.bf16.msra.mxu0 %v2966
        %2976 = vmatpush.bf16.msra.mxu0 %v2965
        %2977 = vmatpush.bf16.msra.mxu0 %v2964
        %2978 = vmatpush.bf16.msra.mxu0 %v2963
        %2979 = vmatpush.bf16.msra.mxu0 %v2962
        %2980 = vmatpush.bf16.msra.mxu0 %v2961
        %2981 = vmatpush.bf16.msra.mxu0 %v2960
        %2982 = vmatpush.bf16.msra.mxu0 %v2959
        %2983 = vmatmul.bf16.gmra.mxu0 %v2895
        %v2984 = vpop.f32.mrf.mxu0
        %v2985 = vadd.f32 0.0, %v2984
        %v2986 = vpop.f32.mrf.mxu0
        %v2987 = vadd.f32 0.0, %v2986
        %2988 = vmatmul.bf16.gmra.mxu0 %v2896
        %v2989 = vpop.f32.mrf.mxu0
        %v2990 = vadd.f32 0.0, %v2989
        %v2991 = vpop.f32.mrf.mxu0
        %v2992 = vadd.f32 0.0, %v2991
        %2993 = vmatmul.bf16.gmra.mxu0 %v2897
        %v2994 = vpop.f32.mrf.mxu0
        %v2995 = vadd.f32 0.0, %v2994
        %v2996 = vpop.f32.mrf.mxu0
        %v2997 = vadd.f32 0.0, %v2996
        %2998 = vmatmul.bf16.gmra.mxu0 %v2898
        %v2999 = vpop.f32.mrf.mxu0
        %v3000 = vadd.f32 0.0, %v2999
        %v3001 = vpop.f32.mrf.mxu0
        %v3002 = vadd.f32 0.0, %v3001
        %3003 = vmatmul.bf16.gmra.mxu0 %v2899
        %v3004 = vpop.f32.mrf.mxu0
        %v3005 = vadd.f32 0.0, %v3004
        %v3006 = vpop.f32.mrf.mxu0
        %v3007 = vadd.f32 0.0, %v3006
        %3008 = vmatmul.bf16.gmra.mxu0 %v2900
        %v3009 = vpop.f32.mrf.mxu0
        %v3010 = vadd.f32 0.0, %v3009
        %v3011 = vpop.f32.mrf.mxu0
        %v3012 = vadd.f32 0.0, %v3011
        %3013 = vmatmul.bf16.gmra.mxu0 %v2901
        %v3014 = vpop.f32.mrf.mxu0
        %v3015 = vadd.f32 0.0, %v3014
        %v3016 = vpop.f32.mrf.mxu0
        %v3017 = vadd.f32 0.0, %v3016
        %3018 = vmatmul.bf16.gmra.mxu0 %v2902
        %v3019 = vpop.f32.mrf.mxu0
        %v3020 = vadd.f32 0.0, %v3019
        %v3021 = vpop.f32.mrf.mxu0
        %v3022 = vadd.f32 0.0, %v3021
        %3023 = vmatmul.bf16.gmra.mxu0 %v2903
        %v3024 = vpop.f32.mrf.mxu0
        %v3025 = vadd.f32 0.0, %v3024
        %v3026 = vpop.f32.mrf.mxu0
        %v3027 = vadd.f32 0.0, %v3026
        %3028 = vmatmul.bf16.gmra.mxu0 %v2904
        %v3029 = vpop.f32.mrf.mxu0
        %v3030 = vadd.f32 0.0, %v3029
        %v3031 = vpop.f32.mrf.mxu0
        %v3032 = vadd.f32 0.0, %v3031
        %3033 = vmatmul.bf16.gmra.mxu0 %v2905
        %v3034 = vpop.f32.mrf.mxu0
        %v3035 = vadd.f32 0.0, %v3034
        %v3036 = vpop.f32.mrf.mxu0
        %v3037 = vadd.f32 0.0, %v3036
        %3038 = vmatmul.bf16.gmra.mxu0 %v2906
        %v3039 = vpop.f32.mrf.mxu0
        %v3040 = vadd.f32 0.0, %v3039
        %v3041 = vpop.f32.mrf.mxu0
        %v3042 = vadd.f32 0.0, %v3041
        %3043 = vmatmul.bf16.gmra.mxu0 %v2907
        %v3044 = vpop.f32.mrf.mxu0
        %v3045 = vadd.f32 0.0, %v3044
        %v3046 = vpop.f32.mrf.mxu0
        %v3047 = vadd.f32 0.0, %v3046
        %3048 = vmatmul.bf16.gmra.mxu0 %v2908
        %v3049 = vpop.f32.mrf.mxu0
        %v3050 = vadd.f32 0.0, %v3049
        %v3051 = vpop.f32.mrf.mxu0
        %v3052 = vadd.f32 0.0, %v3051
        %3053 = vmatmul.bf16.gmra.mxu0 %v2909
        %v3054 = vpop.f32.mrf.mxu0
        %v3055 = vadd.f32 0.0, %v3054
        %v3056 = vpop.f32.mrf.mxu0
        %v3057 = vadd.f32 0.0, %v3056
        %3058 = vmatmul.bf16.gmra.mxu0 %v2910
        %v3059 = vpop.f32.mrf.mxu0
        %v3060 = vadd.f32 0.0, %v3059
        %v3061 = vpop.f32.mrf.mxu0
        %v3062 = vadd.f32 0.0, %v3061
        %3063 = vdwg.mxu0
        %v3064 = vadd.f32 %v2751, %v2985
        %v3065 = vadd.f32 %v2752, %v2987
        %v3066 = vadd.f32 %v2753, %v2990
        %v3067 = vadd.f32 %v2754, %v2992
        %v3068 = vadd.f32 %v2755, %v2995
        %v3069 = vadd.f32 %v2756, %v2997
        %v3070 = vadd.f32 %v2757, %v3000
        %v3071 = vadd.f32 %v2758, %v3002
        %v3072 = vadd.f32 %v2759, %v3005
        %v3073 = vadd.f32 %v2760, %v3007
        %v3074 = vadd.f32 %v2761, %v3010
        %v3075 = vadd.f32 %v2762, %v3012
        %v3076 = vadd.f32 %v2763, %v3015
        %v3077 = vadd.f32 %v2764, %v3017
        %v3078 = vadd.f32 %v2765, %v3020
        %v3079 = vadd.f32 %v2766, %v3022
        %v3080 = vadd.f32 %v2767, %v3025
        %v3081 = vadd.f32 %v2768, %v3027
        %v3082 = vadd.f32 %v2769, %v3030
        %v3083 = vadd.f32 %v2770, %v3032
        %v3084 = vadd.f32 %v2771, %v3035
        %v3085 = vadd.f32 %v2772, %v3037
        %v3086 = vadd.f32 %v2773, %v3040
        %v3087 = vadd.f32 %v2774, %v3042
        %v3088 = vadd.f32 %v2775, %v3045
        %v3089 = vadd.f32 %v2776, %v3047
        %v3090 = vadd.f32 %v2777, %v3050
        %v3091 = vadd.f32 %v2778, %v3052
        %v3092 = vadd.f32 %v2779, %v3055
        %v3093 = vadd.f32 %v2780, %v3057
        %v3094 = vadd.f32 %v2781, %v3060
        %v3095 = vadd.f32 %v2782, %v3062
        %v3096 = vld [vmem:[%s4] sm:$0x1]
        %v3098 = vperm.slane %v3096, 0
        %v3100 = vadd.f32 %v3064, %v3098
        %v3101 = vadd.f32 %v3065, %v3098
        %v3102 = vadd.f32 %v3066, %v3098
        %v3103 = vadd.f32 %v3067, %v3098
        %v3104 = vadd.f32 %v3068, %v3098
        %v3105 = vadd.f32 %v3069, %v3098
        %v3106 = vadd.f32 %v3070, %v3098
        %v3107 = vadd.f32 %v3071, %v3098
        %v3108 = vadd.f32 %v3072, %v3098
        %v3109 = vadd.f32 %v3073, %v3098
        %v3110 = vadd.f32 %v3074, %v3098
        %v3111 = vadd.f32 %v3075, %v3098
        %v3112 = vadd.f32 %v3076, %v3098
        %v3113 = vadd.f32 %v3077, %v3098
        %v3114 = vadd.f32 %v3078, %v3098
        %v3115 = vadd.f32 %v3079, %v3098
        %v3116 = vadd.f32 %v3080, %v3098
        %v3117 = vadd.f32 %v3081, %v3098
        %v3118 = vadd.f32 %v3082, %v3098
        %v3119 = vadd.f32 %v3083, %v3098
        %v3120 = vadd.f32 %v3084, %v3098
        %v3121 = vadd.f32 %v3085, %v3098
        %v3122 = vadd.f32 %v3086, %v3098
        %v3123 = vadd.f32 %v3087, %v3098
        %v3124 = vadd.f32 %v3088, %v3098
        %v3125 = vadd.f32 %v3089, %v3098
        %v3126 = vadd.f32 %v3090, %v3098
        %v3127 = vadd.f32 %v3091, %v3098
        %v3128 = vadd.f32 %v3092, %v3098
        %v3129 = vadd.f32 %v3093, %v3098
        %v3130 = vadd.f32 %v3094, %v3098
        %v3131 = vadd.f32 %v3095, %v3098
        %v3132 = vmax.f32 %v3100, 0.0
        %v3133 = vmax.f32 %v3101, 0.0
        %v3134 = vmax.f32 %v3102, 0.0
        %v3135 = vmax.f32 %v3103, 0.0
        %v3136 = vmax.f32 %v3104, 0.0
        %v3137 = vmax.f32 %v3105, 0.0
        %v3138 = vmax.f32 %v3106, 0.0
        %v3139 = vmax.f32 %v3107, 0.0
        %v3140 = vmax.f32 %v3108, 0.0
        %v3141 = vmax.f32 %v3109, 0.0
        %v3142 = vmax.f32 %v3110, 0.0
        %v3143 = vmax.f32 %v3111, 0.0
        %v3144 = vmax.f32 %v3112, 0.0
        %v3145 = vmax.f32 %v3113, 0.0
        %v3146 = vmax.f32 %v3114, 0.0
        %v3147 = vmax.f32 %v3115, 0.0
        %v3148 = vmax.f32 %v3116, 0.0
        %v3149 = vmax.f32 %v3117, 0.0
        %v3150 = vmax.f32 %v3118, 0.0
        %v3151 = vmax.f32 %v3119, 0.0
        %v3152 = vmax.f32 %v3120, 0.0
        %v3153 = vmax.f32 %v3121, 0.0
        %v3154 = vmax.f32 %v3122, 0.0
        %v3155 = vmax.f32 %v3123, 0.0
        %v3156 = vmax.f32 %v3124, 0.0
        %v3157 = vmax.f32 %v3125, 0.0
        %v3158 = vmax.f32 %v3126, 0.0
        %v3159 = vmax.f32 %v3127, 0.0
        %v3160 = vmax.f32 %v3128, 0.0
        %v3161 = vmax.f32 %v3129, 0.0
        %v3162 = vmax.f32 %v3130, 0.0
        %v3163 = vmax.f32 %v3131, 0.0
        %v3164 = vpack.c.bf16 %v3132, %v3132
        %v3165 = vpack.c.bf16 %v3133, %v3133
        %v3166 = vpack.c.bf16 %v3134, %v3134
        %v3167 = vpack.c.bf16 %v3135, %v3135
        %v3168 = vpack.c.bf16 %v3136, %v3136
        %v3169 = vpack.c.bf16 %v3137, %v3137
        %v3170 = vpack.c.bf16 %v3138, %v3138
        %v3171 = vpack.c.bf16 %v3139, %v3139
        %v3172 = vpack.c.bf16 %v3140, %v3140
        %v3173 = vpack.c.bf16 %v3141, %v3141
        %v3174 = vpack.c.bf16 %v3142, %v3142
        %v3175 = vpack.c.bf16 %v3143, %v3143
        %v3176 = vpack.c.bf16 %v3144, %v3144
        %v3177 = vpack.c.bf16 %v3145, %v3145
        %v3178 = vpack.c.bf16 %v3146, %v3146
        %v3179 = vpack.c.bf16 %v3147, %v3147
        %v3180 = vpack.c.bf16 %v3148, %v3148
        %v3181 = vpack.c.bf16 %v3149, %v3149
        %v3182 = vpack.c.bf16 %v3150, %v3150
        %v3183 = vpack.c.bf16 %v3151, %v3151
        %v3184 = vpack.c.bf16 %v3152, %v3152
        %v3185 = vpack.c.bf16 %v3153, %v3153
        %v3186 = vpack.c.bf16 %v3154, %v3154
        %v3187 = vpack.c.bf16 %v3155, %v3155
        %v3188 = vpack.c.bf16 %v3156, %v3156
        %v3189 = vpack.c.bf16 %v3157, %v3157
        %v3190 = vpack.c.bf16 %v3158, %v3158
        %v3191 = vpack.c.bf16 %v3159, %v3159
        %v3192 = vpack.c.bf16 %v3160, %v3160
        %v3193 = vpack.c.bf16 %v3161, %v3161
        %v3194 = vpack.c.bf16 %v3162, %v3162
        %v3195 = vpack.c.bf16 %v3163, %v3163
        %3196 = vst [vmem:[%s342] sm:$0xf] %v3164
        %3197 = vst [vmem:[%s342 + $0x4] sm:$0xf] %v3165
        %3198 = vst [vmem:[%s342 + $0x8] sm:$0xf] %v3166
        %3199 = vst [vmem:[%s342 + $0xc] sm:$0xf] %v3167
        %3200 = vst [vmem:[%s342 + $0x10] sm:$0xf] %v3168
        %3201 = vst [vmem:[%s342 + $0x14] sm:$0xf] %v3169
        %3202 = vst [vmem:[%s342 + $0x18] sm:$0xf] %v3170
        %3203 = vst [vmem:[%s342 + $0x1c] sm:$0xf] %v3171
        %3204 = vst [vmem:[%s342 + $0x20] sm:$0xf] %v3172
        %3205 = vst [vmem:[%s342 + $0x24] sm:$0xf] %v3173
        %3206 = vst [vmem:[%s342 + $0x28] sm:$0xf] %v3174
        %3207 = vst [vmem:[%s342 + $0x2c] sm:$0xf] %v3175
        %3208 = vst [vmem:[%s342 + $0x30] sm:$0xf] %v3176
        %3209 = vst [vmem:[%s342 + $0x34] sm:$0xf] %v3177
        %3210 = vst [vmem:[%s342 + $0x38] sm:$0xf] %v3178
        %3211 = vst [vmem:[%s342 + $0x3c] sm:$0xf] %v3179
        %3212 = vst [vmem:[%s342 + $0x40] sm:$0xf] %v3180
        %3213 = vst [vmem:[%s342 + $0x44] sm:$0xf] %v3181
        %3214 = vst [vmem:[%s342 + $0x48] sm:$0xf] %v3182
        %3215 = vst [vmem:[%s342 + $0x4c] sm:$0xf] %v3183
        %3216 = vst [vmem:[%s342 + $0x50] sm:$0xf] %v3184
        %3217 = vst [vmem:[%s342 + $0x54] sm:$0xf] %v3185
        %3218 = vst [vmem:[%s342 + $0x58] sm:$0xf] %v3186
        %3219 = vst [vmem:[%s342 + $0x5c] sm:$0xf] %v3187
        %3220 = vst [vmem:[%s342 + $0x60] sm:$0xf] %v3188
        %3221 = vst [vmem:[%s342 + $0x64] sm:$0xf] %v3189
        %3222 = vst [vmem:[%s342 + $0x68] sm:$0xf] %v3190
        %3223 = vst [vmem:[%s342 + $0x6c] sm:$0xf] %v3191
        %3224 = vst [vmem:[%s342 + $0x70] sm:$0xf] %v3192
        %3225 = vst [vmem:[%s342 + $0x74] sm:$0xf] %v3193
        %3226 = vst [vmem:[%s342 + $0x78] sm:$0xf] %v3194
        %3227 = vst [vmem:[%s342 + $0x7c] sm:$0xf] %v3195
        %s3228 = sand.u32 %s154, 1
        %s3229 = scalar_lea.sflag [#allocation4], %s3228
        %s3230 = sand.u32 %s154, 1
        %s3231 = smul.addr %s3230, 128
        %s3232 = scalar_lea.vmem [#allocation10], %s3231
        // Predicated region
        $region57: #{tpu_custom_call.1} parent=39 // pred_check
          %p3233 = pneg %p164
        $region58: #{tpu_custom_call.1} parent=39 // pred_check_branch
          %3235 = sbr.rel (%p3233) target = $region60
        $region59: #{tpu_custom_call.1} parent=39 // pred_region
          %3237 = vsyncadd %s3229, 0
          %s3238 = smul.addr %s26, 32
          %s3239 = smul.addr %s3238, 4
          %s3240 = scalar_lea.hbm %s5, %s3239
          %s3241 = sshll.u32 %s3232, 4
          %s3242 = int_to_ptr.vmem [resolvable:$true] %s3241
          %s3243 = sshll.u32 %s3240, 4
          %s3244 = int_to_ptr.hbm [resolvable:$true] %s3243
          %3249 = dma.vmem_to_hbm [thread:$0]  %s3242, 2048, %s3244, %s3229, 64, 64, 4
        $region60: #{tpu_custom_call.1} parent=39 // pred_fallthru
          _
      $region40: #{tpu_custom_call.1} parent=5 // pred_fallthru
        _
      %p3250 = scmp.le.s32.totalorder 2, %s21
      // Predicated region
      $region61: #{tpu_custom_call.1} parent=5 // pred_check
        %p3251 = pneg %p3250
      $region62: #{tpu_custom_call.1} parent=5 // pred_check_branch
        %3253 = sbr.rel (%p3251) target = $region64
      $region63: #{tpu_custom_call.1} parent=5 // pred_region
        %s3254 = ssub.s32 %s21, 2
        // Predicated region
        $region65: #{tpu_custom_call.1} parent=63 // pred_check
          %p3255 = pneg %p170
        $region66: #{tpu_custom_call.1} parent=63 // pred_check_branch
          %3257 = sbr.rel (%p3255) target = $region68
        $region67: #{tpu_custom_call.1} parent=63 // pred_region
          %s3258 = sand.u32 %s155, 1
          %s3259 = scalar_lea.sflag [#allocation4], %s3258
          %s3260 = sand.u32 %s155, 1
          %s3261 = smul.addr %s3260, 128
          %s3262 = scalar_lea.vmem [#allocation10], %s3261
          %3264 = dma.done %s3259, 2048
        $region68: #{tpu_custom_call.1} parent=63 // pred_fallthru
          _
      $region64: #{tpu_custom_call.1} parent=5 // pred_fallthru
        _
    $region6: #{tpu_custom_call.1} parent=1 // loop_footer
      %s25 = sadd.s32 1, %s21
    $region7: #{tpu_custom_call.1} parent=1 // loop_footer_branch
      %20 = sbr.rel target = $region3
    $region8: #{tpu_custom_call.1} parent=1 // loop_exit
      _
    %3265 = vsyncpa [#allocation3], 1
    %s3266 = scalar_lea.sflag [#allocation3], 1
    %3267 = vsyncpa %s3266, 1
    %3268 = vsyncpa [#allocation6], 1
    %s3269 = scalar_lea.sflag [#allocation6], 1
    %3270 = vsyncpa %s3269, 1
    %3271 = vsyncpa [#allocation9], 1
    %3272 = vsyncpa [#allocation4], 1
    %s3273 = scalar_lea.sflag [#allocation4], 1
    %3274 = vsyncpa %s3273, 1

</llo_original>
